<compile_context>
chip_gen: v7x
topology: tpu7x:2x2x1
jax: 0.10.0
libtpu: 0.0.40
codegen_flags: <defaults>
</compile_context>

<pallas_src>
import jax
import jax.numpy as jnp
from jax.experimental import pallas as pl
from jax.experimental.pallas import tpu as pltpu

C_IN = 1024
C_OUT = 10
LANE = 128


def _round_up(x, m):
    return ((x + m - 1) // m) * m


def _pick_tile(total, target, lane=LANE):
    """Largest multiple of `lane` that divides `total` and is <= target."""
    best = lane
    t = lane
    limit = max(lane, min(target, total))
    while t <= limit:
        if total % t == 0:
            best = t
        t += lane
    return best


def conv_relu_kernel(x_ref, w_ref, o_ref):
    """One (batch, HW-tile) block: W(c_pad,Cin) @ x(Cin,t_hw) on the MXU + ReLU.

    x arrives in its HBM dtype (f32, no wrapper cast) and is cast to bf16
    in-register; MXU accumulates in f32; the padded output is stored as bf16.
    """
    x = x_ref[...].astype(jnp.bfloat16)               # (C_IN, t_hw)
    y = jnp.dot(w_ref[...], x, preferred_element_type=jnp.float32)
    o_ref[...] = jnp.maximum(y, 0.0).astype(o_ref.dtype)


def layer14_forward(x_nchw, w_conv, *, t_hw_target=1024):
    """Conv2d(1024->10, 1x1, bias=False) + ReLU.  NCHW in / NCHW out."""
    N, C, H, W = x_nchw.shape
    assert C == C_IN
    c_out = w_conv.shape[0]
    HW = H * W

    # Weight: (c_out, C_IN, 1, 1) -> (c_pad, C_IN) bf16, rows 10..127 zeroed so
    # the output block is a full 128-lane slab (unmasked stores).  Tiny array,
    # so this wrapper-side cast/pad is negligible traffic.
    c_pad = _round_up(max(c_out, LANE), LANE)
    w_mat = w_conv.reshape(c_out, C_IN).astype(jnp.bfloat16)
    w_pad = jnp.zeros((c_pad, C_IN), dtype=jnp.bfloat16).at[:c_out, :].set(w_mat)

    # Free reshape of the NCHW activation: (N, C_IN, H*W).  No transpose/cast.
    x = x_nchw.reshape(N, C_IN, HW)

    # Pad the H*W axis to a multiple of 128 only if needed (zero columns are
    # harmless: relu(W @ 0) = 0, and they are sliced off below).  Not hit for
    # typical NiN spatial sizes that are multiples of 128.
    HWp = _round_up(HW, LANE)
    if HWp != HW:
        x = jnp.pad(x, ((0, 0), (0, 0), (0, HWp - HW)))

    # HW tiling: largest 128-multiple divisor of HWp, capped at the target.
    t_hw = _pick_tile(HWp, t_hw_target)
    # v7x megacore: ensure >= 2 grid steps when possible so both TCs get work.
    if N * (HWp // t_hw) < 2 and HWp >= 2 * LANE:
        t_hw = _pick_tile(HWp, (HWp // (2 * LANE)) * LANE)

    grid = (N, HWp // t_hw)

    cost = pl.CostEstimate(
        flops=2 * N * HWp * C_IN * c_pad,
        transcendentals=0,
        bytes_accessed=(x.size * x.dtype.itemsize          # activation read
                        + w_pad.size * 2                    # weight (once)
                        + N * c_pad * HWp * 2),             # bf16 padded output
    )

    out_pad = pl.pallas_call(
        conv_relu_kernel,
        out_shape=jax.ShapeDtypeStruct((N, c_pad, HWp), jnp.bfloat16),
        grid_spec=pltpu.PrefetchScalarGridSpec(
            num_scalar_prefetch=0,
            grid=grid,
            in_specs=[
                # x: batch dim squeezed, full channel dim, one HW tile.
                pl.BlockSpec((None, C_IN, t_hw), lambda n, j: (n, 0, j)),
                # weight: constant block index -> fetched once, stays resident.
                pl.BlockSpec((c_pad, C_IN), lambda n, j: (0, 0)),
            ],
            out_specs=pl.BlockSpec((None, c_pad, t_hw), lambda n, j: (n, 0, j)),
        ),
        compiler_params=pltpu.CompilerParams(
            dimension_semantics=("parallel", "parallel"),
        ),
        cost_estimate=cost,
    )(x, w_pad)

    # Drop the padded channels / HW columns; small slice, back to NCHW f32.
    out = out_pad[:, :c_out, :HW].reshape(N, c_out, H, W)
    return out.astype(x_nchw.dtype)


def layer14_reference(x_nchw, w_conv):
    """Plain-JAX f32 reference of the PyTorch forward."""
    c_out = w_conv.shape[0]
    w = w_conv.reshape(c_out, C_IN)
    y = jnp.einsum("nchw,oc->nohw", x_nchw, w)
    return jnp.maximum(y, 0.0)


if __name__ == "__main__":
    key = jax.random.PRNGKey(0)
    k_x, k_w = jax.random.split(key)

    # Small demo shapes; input channel count is fixed to 1024 by the module.
    # H*W = 256 is a multiple of 128 -> no padding path, grid = (2, 1).
    N, H, W = 2, 16, 16
    x = jax.random.normal(k_x, (N, C_IN, H, W), dtype=jnp.float32)

    # Conv weight: (10, 1024, 1, 1), no bias.
    w_conv = jax.random.normal(k_w, (C_OUT, C_IN, 1, 1), dtype=jnp.float32) * 0.02

    out = jax.block_until_ready(layer14_forward(x, w_conv))
    ref = jax.block_until_ready(layer14_reference(x, w_conv))

    assert out.shape == (N, C_OUT, H, W)
    # bf16 matmul inputs + bf16 output store with f32 accumulation -> small
    # rounding vs the f32 reference.
    assert jnp.allclose(out, ref, atol=2e-2, rtol=2e-2)
    print("KERNEL_OK")
</pallas_src>

<mosaic_0001>
module attributes {stable_mosaic.version = 11 : i64} {
  func.func @conv_relu_kernel(%arg0: i32, %arg1: i32, %arg2: memref<1x1024x256xf32, #tpu.memory_space<vmem>>, %arg3: memref<128x1024xbf16, #tpu.memory_space<vmem>>, %arg4: memref<1x128x256xbf16, #tpu.memory_space<vmem>>) attributes {dimension_semantics = [#tpu.dimension_semantics<parallel>, #tpu.dimension_semantics<parallel>], iteration_bounds = array<i64: 2, 1>, scalar_prefetch = 0 : i64, scratch_operands = 0 : i64, tpu.core_type = #tpu.core_type<tc>, window_params = [{transform_indices = @transform_0, window_bounds = array<i64: 1, 1024, 256>}, {pipeline_mode = #tpu.pipeline_mode<synchronous>, transform_indices = @transform_1, window_bounds = array<i64: 128, 1024>}, {transform_indices = @transform_2, window_bounds = array<i64: 1, 128, 256>}]} {
    %c0 = arith.constant 0 : index
    %c0_0 = arith.constant 0 : index
    %c0_1 = arith.constant 0 : index
    %0 = vector.load %arg2[%c0, %c0_0, %c0_1] : memref<1x1024x256xf32, #tpu.memory_space<vmem>>, vector<1x1024x256xf32>
    %1 = vector.shape_cast %0 : vector<1x1024x256xf32> to vector<1024x256xf32>
    %2 = arith.truncf %1 : vector<1024x256xf32> to vector<1024x256xbf16>
    %c0_2 = arith.constant 0 : index
    %c0_3 = arith.constant 0 : index
    %3 = vector.load %arg3[%c0_2, %c0_3] : memref<128x1024xbf16, #tpu.memory_space<vmem>>, vector<128x1024xbf16>
    %cst = arith.constant dense<0.000000e+00> : vector<128x256xf32>
    %4 = tpu.matmul %3, %2, %cst {dimension_numbers = #tpu.dot_dimension_numbers<[1], [0], [0], [1], [0, 0, 1, 1], [], []>} : vector<128x1024xbf16>, vector<1024x256xbf16>, vector<128x256xf32> -> vector<128x256xf32>
    %cst_4 = arith.constant 0.000000e+00 : f32
    %5 = vector.broadcast %cst_4 : f32 to vector<128x256xf32>
    %6 = arith.maximumf %4, %5 : vector<128x256xf32>
    %7 = arith.truncf %6 : vector<128x256xf32> to vector<128x256xbf16>
    %c0_5 = arith.constant 0 : index
    %c0_6 = arith.constant 0 : index
    %c0_7 = arith.constant 0 : index
    %8 = vector.load %arg4[%c0_5, %c0_6, %c0_7] : memref<1x128x256xbf16, #tpu.memory_space<vmem>>, vector<1x128x256xbf16>
    %9 = vector.shape_cast %8 : vector<1x128x256xbf16> to vector<128x256xbf16>
    %10 = vector.shape_cast %7 : vector<128x256xbf16> to vector<1x128x256xbf16>
    tpu.vector_store %arg4[%c0_5, %c0_6, %c0_7], %10 {strides = array<i32>} : memref<1x128x256xbf16, #tpu.memory_space<vmem>>, vector<1x128x256xbf16>,
    return
  }
  func.func @transform_0(%arg0: i32, %arg1: i32) -> (i32, i32, i32) {
    %c0_i32 = arith.constant 0 : i32
    %c0_i32_0 = arith.constant 0 : i32
    return %arg0, %c0_i32, %arg1 : i32, i32, i32
  }
  func.func @transform_1(%arg0: i32, %arg1: i32) -> (i32, i32) {
    %c0_i32 = arith.constant 0 : i32
    %c0_i32_0 = arith.constant 0 : i32
    %c0_i32_1 = arith.constant 0 : i32
    return %c0_i32, %c0_i32_0 : i32, i32
  }
  func.func @transform_2(%arg0: i32, %arg1: i32) -> (i32, i32, i32) {
    %c0_i32 = arith.constant 0 : i32
    %c0_i32_0 = arith.constant 0 : i32
    return %arg0, %c0_i32, %arg1 : i32, i32, i32
  }
}

</mosaic_0001>

<llo_original>
// kernel: tpu_custom_call.1
$region0: #{tpu_custom_call.1}
  #allocation0 [shape = 'u32[]', space=smem, size = 0x4, offset = 0x4, fixed_abs, tag = 'smem constant byte address 0x4 - core index']
  #allocation1 [shape = 'u32[144,128]{1,0:T(1,128)}', space=vmem, size = 0x12000, scoped, tag = 'internal scratch']
  %s0 = inlined_call_operand.hbm [shape: f32[2,1024,256], index: 0, kind: input, shape index: {}]
  %s1 = inlined_call_operand.hbm [shape: bf16[128,1024], index: 1, kind: input, shape index: {}]
  %s2 = inlined_call_operand.hbm [shape: bf16[2,128,256], index: 2, kind: output, shape index: {}]
  %s3 = sld [smem:[#allocation0]]
  $region49: #{tpu_custom_call.1} parent=0
    _
  %s5 = ssub.s32 1, %s3
  %s6 = scalar_select 0, %s5, %s3
  $region1: #{tpu_custom_call.1} parent=0
    #allocation2 [shape = 'u8[2097152]{0}', space=vmem, size = 0x200000, scoped, tag = 'input window, operand 0']
    #allocation3 [shape = 's32[2]{0}', space=sflag, size = 0x8, scoped, tag = 'scoped memory for tpu_custom_call.1']
    #allocation4 [shape = 's32[2]{0}', space=sflag, size = 0x8, scoped, tag = 'scoped memory for tpu_custom_call.1']
    #allocation5 [shape = 'u8[262144]{0}', space=vmem, size = 0x40000, scoped, tag = 'input window, operand 1, single buffered']
    #allocation6 [shape = 's32[1]{0}', space=sflag, size = 0x4, scoped, tag = 'scoped memory for tpu_custom_call.1']
    #allocation7 [shape = 'u8[131072]{0}', space=vmem, size = 0x20000, scoped, tag = 'output window, operand 0']
    %7 = vsyncpa [#allocation3], 0
    %s8 = scalar_lea.sflag [#allocation3], 1
    %9 = vsyncpa %s8, 0
    %10 = vsyncpa [#allocation6], 0
    %11 = vsyncpa [#allocation4], 0
    %s12 = scalar_lea.sflag [#allocation4], 1
    %13 = vsyncpa %s12, 0
    loop: start=0, step=1, limit=4
    $region2: #{tpu_custom_call.1} parent=1 // loop_pre_header
      _
    $region3: #{tpu_custom_call.1} parent=1 // loop_header
      %s15 = sphi 0, %s19
      %p16 = scmp.ge.s32.totalorder %s15, 4
      %s22 = sphi 0, %s34
      %s23 = sphi 0, %s30
      %s24 = sphi 0, %s22
      %s25 = sphi 0, %s23
      %s26 = sphi 0, %s24
      %s27 = sphi 0, %s25
      %s39 = sphi 0, %s41
      %s42 = sphi 0, %s39
      %s43 = sphi 0, %s42
      %s59 = sphi 0, %s43
      %s63 = sphi 0, %s63
      %s65 = sphi 0, %s63
      %s66 = sphi 0, %s65
      %s80 = sphi 0, %s66
      %s88 = sphi 0, %s90
      %s91 = sphi 0, %s88
      %s92 = sphi 0, %s91
      %s108 = sphi 0, %s92
    $region4: #{tpu_custom_call.1} parent=1 // loop_header_branch
      %18 = sbr.rel (%p16) target = $region8
    $region5: #{tpu_custom_call.1} parent=1 // loop_body
      %s20 = ssub.s32 %s15, 1
      %s21 = ssub.s32 %s15, 2
      %s28 = sadd.s32 1, %s23
      %p29 = scmp.ge.s32.totalorder %s28, 1
      %s30 = scalar_select %p29, 0, %s28
      %s31 = sadd.s32 1, %s22
      %s32 = scalar_select %p29, %s31, %s22
      %p33 = scmp.ge.s32.totalorder %s32, 2
      %s34 = scalar_select %p33, 0, %s32
      %s35 = ssub.s32 %s22, %s34
      %s36 = ssub.s32 %s23, %s30
      %s37 = sor.u32 %s35, %s36
      %p38 = scmp.eq.s32.totalorder %s37, 0
      %s40 = sadd.s32 %s39, 1
      %s41 = scalar_select %p38, %s39, %s40
      %p44 = pneg %p38
      %p45 = scmp.eq.s32.totalorder %s15, 1
      %p46 = por %p44, %p45
      %p47 = scmp.ne.s32.totalorder %s39, %s42
      %p48 = scmp.eq.s32.totalorder %s15, 0
      %p49 = por %p47, %p48
      %p50 = scmp.ne.s32.totalorder %s39, %s42
      %p51 = scmp.eq.s32.totalorder %s20, 1
      %p52 = por %p50, %p51
      %p53 = scmp.ne.s32.totalorder %s42, %s43
      %p54 = scmp.eq.s32.totalorder %s20, 0
      %p55 = por %p53, %p54
      %p56 = scmp.ne.s32.totalorder %s42, %s43
      %p57 = scmp.eq.s32.totalorder %s21, 1
      %p58 = por %p56, %p57
      %p60 = scmp.ne.s32.totalorder %s43, %s59
      %p61 = scmp.eq.s32.totalorder %s21, 0
      %p62 = por %p60, %p61
      %s64 = sadd.s32 %s63, 1
      %p67 = scmp.eq.s32.totalorder %s15, 1
      %p68 = scmp.ne.s32.totalorder %s63, %s65
      %p69 = scmp.eq.s32.totalorder %s15, 0
      %p70 = por %p68, %p69
      %p71 = scmp.ne.s32.totalorder %s63, %s65
      %p72 = scmp.eq.s32.totalorder %s20, 1
      %p73 = por %p71, %p72
      %p74 = scmp.ne.s32.totalorder %s65, %s66
      %p75 = scmp.eq.s32.totalorder %s20, 0
      %p76 = por %p74, %p75
      %p77 = scmp.ne.s32.totalorder %s65, %s66
      %p78 = scmp.eq.s32.totalorder %s21, 1
      %p79 = por %p77, %p78
      %p81 = scmp.ne.s32.totalorder %s66, %s80
      %p82 = scmp.eq.s32.totalorder %s21, 0
      %p83 = por %p81, %p82
      %s84 = ssub.s32 %s22, %s34
      %s85 = ssub.s32 %s23, %s30
      %s86 = sor.u32 %s84, %s85
      %p87 = scmp.eq.s32.totalorder %s86, 0
      %s89 = sadd.s32 %s88, 1
      %s90 = scalar_select %p87, %s88, %s89
      %p93 = pneg %p87
      %p94 = scmp.eq.s32.totalorder %s15, 1
      %p95 = por %p93, %p94
      %p96 = scmp.ne.s32.totalorder %s88, %s91
      %p97 = scmp.eq.s32.totalorder %s15, 0
      %p98 = por %p96, %p97
      %p99 = scmp.ne.s32.totalorder %s88, %s91
      %p100 = scmp.eq.s32.totalorder %s20, 1
      %p101 = por %p99, %p100
      %p102 = scmp.ne.s32.totalorder %s91, %s92
      %p103 = scmp.eq.s32.totalorder %s20, 0
      %p104 = por %p102, %p103
      %p105 = scmp.ne.s32.totalorder %s91, %s92
      %p106 = scmp.eq.s32.totalorder %s21, 1
      %p107 = por %p105, %p106
      %p109 = scmp.ne.s32.totalorder %s92, %s108
      %p110 = scmp.eq.s32.totalorder %s21, 0
      %p111 = por %p109, %p110
      %p112 = scmp.le.s32.totalorder 1, %s15
      %p113 = scmp.lt.s32.totalorder %s15, 3
      %p114 = pnand %p112, %p113
      %p115 = pneg %p114
      // Predicated region
      $region9: #{tpu_custom_call.1} parent=5 // pred_check
        _
      $region10: #{tpu_custom_call.1} parent=5 // pred_check_branch
        %117 = sbr.rel (%p114) target = $region12
      $region11: #{tpu_custom_call.1} parent=5 // pred_region
        %s118 = ssub.s32 %s15, 1
        // Predicated region
        $region13: #{tpu_custom_call.1} parent=11 // pred_check
          %p119 = pneg %p76
        $region14: #{tpu_custom_call.1} parent=11 // pred_check_branch
          %121 = sbr.rel (%p119) target = $region16
        $region15: #{tpu_custom_call.1} parent=11 // pred_region
          %s123 = ssub.s32 8192, 8192
          %124 = vsyncadd [#allocation6], %s123
          %s125 = sshll.u32 [#allocation5], 4
          %s126 = int_to_ptr.vmem [resolvable:$true] %s125
          %131 = dma.hbm_to_vmem [thread:$0]  %s1, 8192, %s126, [#allocation6], 512, 512, 32
        $region16: #{tpu_custom_call.1} parent=11 // pred_fallthru
          _
      $region12: #{tpu_custom_call.1} parent=5 // pred_fallthru
        _
      %p132 = scmp.lt.s32.totalorder %s15, 2
      // Predicated region
      $region17: #{tpu_custom_call.1} parent=5 // pred_check
        %p133 = pneg %p132
      $region18: #{tpu_custom_call.1} parent=5 // pred_check_branch
        %135 = sbr.rel (%p133) target = $region20
      $region19: #{tpu_custom_call.1} parent=5 // pred_region
        // Predicated region
        $region21: #{tpu_custom_call.1} parent=19 // pred_check
          %p136 = pneg %p49
        $region22: #{tpu_custom_call.1} parent=19 // pred_check_branch
          %138 = sbr.rel (%p136) target = $region24
        $region23: #{tpu_custom_call.1} parent=19 // pred_region
          %s139 = sand.u32 %s39, 1
          %s140 = scalar_lea.sflag [#allocation3], %s139
          %s141 = sand.u32 %s39, 1
          %s142 = smul.addr %s141, 2048
          %s143 = scalar_lea.vmem [#allocation2], %s142
          %s144 = smul.u32 2, %s23
          %s146 = ssub.s32 32768, 32768
          %147 = vsyncadd %s140, %s146
          %s148 = smul.addr %s22, 256
          %s149 = sadd.s32 %s144, %s148
          %s150 = smul.addr %s149, 128
          %s151 = scalar_lea.hbm %s0, %s150
          %s152 = sshll.u32 %s143, 4
          %s153 = int_to_ptr.vmem [resolvable:$true] %s152
          %158 = dma.hbm_to_vmem [thread:$0]  %s151, 32768, %s153, %s140, 256, 256, 16
        $region24: #{tpu_custom_call.1} parent=19 // pred_fallthru
          _
      $region20: #{tpu_custom_call.1} parent=5 // pred_fallthru
        _
      %p159 = scmp.le.s32.totalorder 1, %s15
      %p160 = scmp.lt.s32.totalorder %s15, 3
      %p161 = pnand %p159, %p160
      %p162 = pneg %p161
      // Predicated region
      $region25: #{tpu_custom_call.1} parent=5 // pred_check
        _
      $region26: #{tpu_custom_call.1} parent=5 // pred_check_branch
        %164 = sbr.rel (%p161) target = $region28
      $region27: #{tpu_custom_call.1} parent=5 // pred_region
        %s165 = ssub.s32 %s15, 1
        %s166 = sand.u32 %s42, 1
        %s167 = scalar_lea.sflag [#allocation3], %s166
        %s168 = sand.u32 %s42, 1
        %s169 = smul.addr %s168, 2048
        %s170 = scalar_lea.vmem [#allocation2], %s169
        // Predicated region
        $region29: #{tpu_custom_call.1} parent=27 // pred_check
          %p171 = pneg %p55
        $region30: #{tpu_custom_call.1} parent=27 // pred_check_branch
          %173 = sbr.rel (%p171) target = $region32
        $region31: #{tpu_custom_call.1} parent=27 // pred_region
          %174 = dma.done %s167, 32768
        $region32: #{tpu_custom_call.1} parent=27 // pred_fallthru
          _
        // Predicated region
        $region33: #{tpu_custom_call.1} parent=27 // pred_check
          %p175 = pneg %p76
        $region34: #{tpu_custom_call.1} parent=27 // pred_check_branch
          %177 = sbr.rel (%p175) target = $region36
        $region35: #{tpu_custom_call.1} parent=27 // pred_region
          %178 = dma.done [#allocation6], 8192
        $region36: #{tpu_custom_call.1} parent=27 // pred_fallthru
          _
        %s179 = sand.u32 %s42, 1
        %s180 = scalar_lea.sflag [#allocation3], %s179
        %s181 = sand.u32 %s42, 1
        %s182 = smul.addr %s181, 2048
        %s183 = scalar_lea.vmem [#allocation2], %s182
        %p184 = pneg %p55
        %p185 = pneg %p52
        %p186 = pneg %p76
        %p187 = pneg %p73
        %p188 = pneg %p104
        %p189 = pneg %p101
        %s190 = sand.u32 %s91, 1
        %s191 = scalar_lea.sflag [#allocation4], %s190
        %s192 = sand.u32 %s91, 1
        %s193 = smul.addr %s192, 128
        %s194 = scalar_lea.vmem [#allocation7], %s193
        %s195 = smul.u32 2, %s25
        %s196 = smul.u32 2, %s25
        %v197 = vld [vmem:[%s170] sm:$0xff]
        %v198 = vld [vmem:[%s170 + $0x8] sm:$0xff]
        %v199 = vld [vmem:[%s170 + $0x10] sm:$0xff]
        %v200 = vld [vmem:[%s170 + $0x18] sm:$0xff]
        %v201 = vld [vmem:[%s170 + $0x20] sm:$0xff]
        %v202 = vld [vmem:[%s170 + $0x28] sm:$0xff]
        %v203 = vld [vmem:[%s170 + $0x30] sm:$0xff]
        %v204 = vld [vmem:[%s170 + $0x38] sm:$0xff]
        %v205 = vld [vmem:[%s170 + $0x40] sm:$0xff]
        %v206 = vld [vmem:[%s170 + $0x48] sm:$0xff]
        %v207 = vld [vmem:[%s170 + $0x50] sm:$0xff]
        %v208 = vld [vmem:[%s170 + $0x58] sm:$0xff]
        %v209 = vld [vmem:[%s170 + $0x60] sm:$0xff]
        %v210 = vld [vmem:[%s170 + $0x68] sm:$0xff]
        %v211 = vld [vmem:[%s170 + $0x70] sm:$0xff]
        %v212 = vld [vmem:[%s170 + $0x78] sm:$0xff]
        %v213 = vld [vmem:[%s170 + $0x80] sm:$0xff]
        %v214 = vld [vmem:[%s170 + $0x88] sm:$0xff]
        %v215 = vld [vmem:[%s170 + $0x90] sm:$0xff]
        %v216 = vld [vmem:[%s170 + $0x98] sm:$0xff]
        %v217 = vld [vmem:[%s170 + $0xa0] sm:$0xff]
        %v218 = vld [vmem:[%s170 + $0xa8] sm:$0xff]
        %v219 = vld [vmem:[%s170 + $0xb0] sm:$0xff]
        %v220 = vld [vmem:[%s170 + $0xb8] sm:$0xff]
        %v221 = vld [vmem:[%s170 + $0xc0] sm:$0xff]
        %v222 = vld [vmem:[%s170 + $0xc8] sm:$0xff]
        %v223 = vld [vmem:[%s170 + $0xd0] sm:$0xff]
        %v224 = vld [vmem:[%s170 + $0xd8] sm:$0xff]
        %v225 = vld [vmem:[%s170 + $0xe0] sm:$0xff]
        %v226 = vld [vmem:[%s170 + $0xe8] sm:$0xff]
        %v227 = vld [vmem:[%s170 + $0xf0] sm:$0xff]
        %v228 = vld [vmem:[%s170 + $0xf8] sm:$0xff]
        %v229 = vld [vmem:[%s170 + $0x100] sm:$0xff]
        %v230 = vld [vmem:[%s170 + $0x108] sm:$0xff]
        %v231 = vld [vmem:[%s170 + $0x110] sm:$0xff]
        %v232 = vld [vmem:[%s170 + $0x118] sm:$0xff]
        %v233 = vld [vmem:[%s170 + $0x120] sm:$0xff]
        %v234 = vld [vmem:[%s170 + $0x128] sm:$0xff]
        %v235 = vld [vmem:[%s170 + $0x130] sm:$0xff]
        %v236 = vld [vmem:[%s170 + $0x138] sm:$0xff]
        %v237 = vld [vmem:[%s170 + $0x140] sm:$0xff]
        %v238 = vld [vmem:[%s170 + $0x148] sm:$0xff]
        %v239 = vld [vmem:[%s170 + $0x150] sm:$0xff]
        %v240 = vld [vmem:[%s170 + $0x158] sm:$0xff]
        %v241 = vld [vmem:[%s170 + $0x160] sm:$0xff]
        %v242 = vld [vmem:[%s170 + $0x168] sm:$0xff]
        %v243 = vld [vmem:[%s170 + $0x170] sm:$0xff]
        %v244 = vld [vmem:[%s170 + $0x178] sm:$0xff]
        %v245 = vld [vmem:[%s170 + $0x180] sm:$0xff]
        %v246 = vld [vmem:[%s170 + $0x188] sm:$0xff]
        %v247 = vld [vmem:[%s170 + $0x190] sm:$0xff]
        %v248 = vld [vmem:[%s170 + $0x198] sm:$0xff]
        %v249 = vld [vmem:[%s170 + $0x1a0] sm:$0xff]
        %v250 = vld [vmem:[%s170 + $0x1a8] sm:$0xff]
        %v251 = vld [vmem:[%s170 + $0x1b0] sm:$0xff]
        %v252 = vld [vmem:[%s170 + $0x1b8] sm:$0xff]
        %v253 = vld [vmem:[%s170 + $0x1c0] sm:$0xff]
        %v254 = vld [vmem:[%s170 + $0x1c8] sm:$0xff]
        %v255 = vld [vmem:[%s170 + $0x1d0] sm:$0xff]
        %v256 = vld [vmem:[%s170 + $0x1d8] sm:$0xff]
        %v257 = vld [vmem:[%s170 + $0x1e0] sm:$0xff]
        %v258 = vld [vmem:[%s170 + $0x1e8] sm:$0xff]
        %v259 = vld [vmem:[%s170 + $0x1f0] sm:$0xff]
        %v260 = vld [vmem:[%s170 + $0x1f8] sm:$0xff]
        %v261 = vld [vmem:[%s170 + $0x200] sm:$0xff]
        %v262 = vld [vmem:[%s170 + $0x208] sm:$0xff]
        %v263 = vld [vmem:[%s170 + $0x210] sm:$0xff]
        %v264 = vld [vmem:[%s170 + $0x218] sm:$0xff]
        %v265 = vld [vmem:[%s170 + $0x220] sm:$0xff]
        %v266 = vld [vmem:[%s170 + $0x228] sm:$0xff]
        %v267 = vld [vmem:[%s170 + $0x230] sm:$0xff]
        %v268 = vld [vmem:[%s170 + $0x238] sm:$0xff]
        %v269 = vld [vmem:[%s170 + $0x240] sm:$0xff]
        %v270 = vld [vmem:[%s170 + $0x248] sm:$0xff]
        %v271 = vld [vmem:[%s170 + $0x250] sm:$0xff]
        %v272 = vld [vmem:[%s170 + $0x258] sm:$0xff]
        %v273 = vld [vmem:[%s170 + $0x260] sm:$0xff]
        %v274 = vld [vmem:[%s170 + $0x268] sm:$0xff]
        %v275 = vld [vmem:[%s170 + $0x270] sm:$0xff]
        %v276 = vld [vmem:[%s170 + $0x278] sm:$0xff]
        %v277 = vld [vmem:[%s170 + $0x280] sm:$0xff]
        %v278 = vld [vmem:[%s170 + $0x288] sm:$0xff]
        %v279 = vld [vmem:[%s170 + $0x290] sm:$0xff]
        %v280 = vld [vmem:[%s170 + $0x298] sm:$0xff]
        %v281 = vld [vmem:[%s170 + $0x2a0] sm:$0xff]
        %v282 = vld [vmem:[%s170 + $0x2a8] sm:$0xff]
        %v283 = vld [vmem:[%s170 + $0x2b0] sm:$0xff]
        %v284 = vld [vmem:[%s170 + $0x2b8] sm:$0xff]
        %v285 = vld [vmem:[%s170 + $0x2c0] sm:$0xff]
        %v286 = vld [vmem:[%s170 + $0x2c8] sm:$0xff]
        %v287 = vld [vmem:[%s170 + $0x2d0] sm:$0xff]
        %v288 = vld [vmem:[%s170 + $0x2d8] sm:$0xff]
        %v289 = vld [vmem:[%s170 + $0x2e0] sm:$0xff]
        %v290 = vld [vmem:[%s170 + $0x2e8] sm:$0xff]
        %v291 = vld [vmem:[%s170 + $0x2f0] sm:$0xff]
        %v292 = vld [vmem:[%s170 + $0x2f8] sm:$0xff]
        %v293 = vld [vmem:[%s170 + $0x300] sm:$0xff]
        %v294 = vld [vmem:[%s170 + $0x308] sm:$0xff]
        %v295 = vld [vmem:[%s170 + $0x310] sm:$0xff]
        %v296 = vld [vmem:[%s170 + $0x318] sm:$0xff]
        %v297 = vld [vmem:[%s170 + $0x320] sm:$0xff]
        %v298 = vld [vmem:[%s170 + $0x328] sm:$0xff]
        %v299 = vld [vmem:[%s170 + $0x330] sm:$0xff]
        %v300 = vld [vmem:[%s170 + $0x338] sm:$0xff]
        %v301 = vld [vmem:[%s170 + $0x340] sm:$0xff]
        %v302 = vld [vmem:[%s170 + $0x348] sm:$0xff]
        %v303 = vld [vmem:[%s170 + $0x350] sm:$0xff]
        %v304 = vld [vmem:[%s170 + $0x358] sm:$0xff]
        %v305 = vld [vmem:[%s170 + $0x360] sm:$0xff]
        %v306 = vld [vmem:[%s170 + $0x368] sm:$0xff]
        %v307 = vld [vmem:[%s170 + $0x370] sm:$0xff]
        %v308 = vld [vmem:[%s170 + $0x378] sm:$0xff]
        %v309 = vld [vmem:[%s170 + $0x380] sm:$0xff]
        %v310 = vld [vmem:[%s170 + $0x388] sm:$0xff]
        %v311 = vld [vmem:[%s170 + $0x390] sm:$0xff]
        %v312 = vld [vmem:[%s170 + $0x398] sm:$0xff]
        %v313 = vld [vmem:[%s170 + $0x3a0] sm:$0xff]
        %v314 = vld [vmem:[%s170 + $0x3a8] sm:$0xff]
        %v315 = vld [vmem:[%s170 + $0x3b0] sm:$0xff]
        %v316 = vld [vmem:[%s170 + $0x3b8] sm:$0xff]
        %v317 = vld [vmem:[%s170 + $0x3c0] sm:$0xff]
        %v318 = vld [vmem:[%s170 + $0x3c8] sm:$0xff]
        %v319 = vld [vmem:[%s170 + $0x3d0] sm:$0xff]
        %v320 = vld [vmem:[%s170 + $0x3d8] sm:$0xff]
        %v321 = vld [vmem:[%s170 + $0x3e0] sm:$0xff]
        %v322 = vld [vmem:[%s170 + $0x3e8] sm:$0xff]
        %v323 = vld [vmem:[%s170 + $0x3f0] sm:$0xff]
        %v324 = vld [vmem:[%s170 + $0x3f8] sm:$0xff]
        %v325 = vld [vmem:[%s170 + $0x400] sm:$0xff]
        %v326 = vld [vmem:[%s170 + $0x408] sm:$0xff]
        %v327 = vld [vmem:[%s170 + $0x410] sm:$0xff]
        %v328 = vld [vmem:[%s170 + $0x418] sm:$0xff]
        %v329 = vld [vmem:[%s170 + $0x420] sm:$0xff]
        %v330 = vld [vmem:[%s170 + $0x428] sm:$0xff]
        %v331 = vld [vmem:[%s170 + $0x430] sm:$0xff]
        %v332 = vld [vmem:[%s170 + $0x438] sm:$0xff]
        %v333 = vld [vmem:[%s170 + $0x440] sm:$0xff]
        %v334 = vld [vmem:[%s170 + $0x448] sm:$0xff]
        %v335 = vld [vmem:[%s170 + $0x450] sm:$0xff]
        %v336 = vld [vmem:[%s170 + $0x458] sm:$0xff]
        %v337 = vld [vmem:[%s170 + $0x460] sm:$0xff]
        %v338 = vld [vmem:[%s170 + $0x468] sm:$0xff]
        %v339 = vld [vmem:[%s170 + $0x470] sm:$0xff]
        %v340 = vld [vmem:[%s170 + $0x478] sm:$0xff]
        %v341 = vld [vmem:[%s170 + $0x480] sm:$0xff]
        %v342 = vld [vmem:[%s170 + $0x488] sm:$0xff]
        %v343 = vld [vmem:[%s170 + $0x490] sm:$0xff]
        %v344 = vld [vmem:[%s170 + $0x498] sm:$0xff]
        %v345 = vld [vmem:[%s170 + $0x4a0] sm:$0xff]
        %v346 = vld [vmem:[%s170 + $0x4a8] sm:$0xff]
        %v347 = vld [vmem:[%s170 + $0x4b0] sm:$0xff]
        %v348 = vld [vmem:[%s170 + $0x4b8] sm:$0xff]
        %v349 = vld [vmem:[%s170 + $0x4c0] sm:$0xff]
        %v350 = vld [vmem:[%s170 + $0x4c8] sm:$0xff]
        %v351 = vld [vmem:[%s170 + $0x4d0] sm:$0xff]
        %v352 = vld [vmem:[%s170 + $0x4d8] sm:$0xff]
        %v353 = vld [vmem:[%s170 + $0x4e0] sm:$0xff]
        %v354 = vld [vmem:[%s170 + $0x4e8] sm:$0xff]
        %v355 = vld [vmem:[%s170 + $0x4f0] sm:$0xff]
        %v356 = vld [vmem:[%s170 + $0x4f8] sm:$0xff]
        %v357 = vld [vmem:[%s170 + $0x500] sm:$0xff]
        %v358 = vld [vmem:[%s170 + $0x508] sm:$0xff]
        %v359 = vld [vmem:[%s170 + $0x510] sm:$0xff]
        %v360 = vld [vmem:[%s170 + $0x518] sm:$0xff]
        %v361 = vld [vmem:[%s170 + $0x520] sm:$0xff]
        %v362 = vld [vmem:[%s170 + $0x528] sm:$0xff]
        %v363 = vld [vmem:[%s170 + $0x530] sm:$0xff]
        %v364 = vld [vmem:[%s170 + $0x538] sm:$0xff]
        %v365 = vld [vmem:[%s170 + $0x540] sm:$0xff]
        %v366 = vld [vmem:[%s170 + $0x548] sm:$0xff]
        %v367 = vld [vmem:[%s170 + $0x550] sm:$0xff]
        %v368 = vld [vmem:[%s170 + $0x558] sm:$0xff]
        %v369 = vld [vmem:[%s170 + $0x560] sm:$0xff]
        %v370 = vld [vmem:[%s170 + $0x568] sm:$0xff]
        %v371 = vld [vmem:[%s170 + $0x570] sm:$0xff]
        %v372 = vld [vmem:[%s170 + $0x578] sm:$0xff]
        %v373 = vld [vmem:[%s170 + $0x580] sm:$0xff]
        %v374 = vld [vmem:[%s170 + $0x588] sm:$0xff]
        %v375 = vld [vmem:[%s170 + $0x590] sm:$0xff]
        %v376 = vld [vmem:[%s170 + $0x598] sm:$0xff]
        %v377 = vld [vmem:[%s170 + $0x5a0] sm:$0xff]
        %v378 = vld [vmem:[%s170 + $0x5a8] sm:$0xff]
        %v379 = vld [vmem:[%s170 + $0x5b0] sm:$0xff]
        %v380 = vld [vmem:[%s170 + $0x5b8] sm:$0xff]
        %v381 = vld [vmem:[%s170 + $0x5c0] sm:$0xff]
        %v382 = vld [vmem:[%s170 + $0x5c8] sm:$0xff]
        %v383 = vld [vmem:[%s170 + $0x5d0] sm:$0xff]
        %v384 = vld [vmem:[%s170 + $0x5d8] sm:$0xff]
        %v385 = vld [vmem:[%s170 + $0x5e0] sm:$0xff]
        %v386 = vld [vmem:[%s170 + $0x5e8] sm:$0xff]
        %v387 = vld [vmem:[%s170 + $0x5f0] sm:$0xff]
        %v388 = vld [vmem:[%s170 + $0x5f8] sm:$0xff]
        %v389 = vld [vmem:[%s170 + $0x600] sm:$0xff]
        %v390 = vld [vmem:[%s170 + $0x608] sm:$0xff]
        %v391 = vld [vmem:[%s170 + $0x610] sm:$0xff]
        %v392 = vld [vmem:[%s170 + $0x618] sm:$0xff]
        %v393 = vld [vmem:[%s170 + $0x620] sm:$0xff]
        %v394 = vld [vmem:[%s170 + $0x628] sm:$0xff]
        %v395 = vld [vmem:[%s170 + $0x630] sm:$0xff]
        %v396 = vld [vmem:[%s170 + $0x638] sm:$0xff]
        %v397 = vld [vmem:[%s170 + $0x640] sm:$0xff]
        %v398 = vld [vmem:[%s170 + $0x648] sm:$0xff]
        %v399 = vld [vmem:[%s170 + $0x650] sm:$0xff]
        %v400 = vld [vmem:[%s170 + $0x658] sm:$0xff]
        %v401 = vld [vmem:[%s170 + $0x660] sm:$0xff]
        %v402 = vld [vmem:[%s170 + $0x668] sm:$0xff]
        %v403 = vld [vmem:[%s170 + $0x670] sm:$0xff]
        %v404 = vld [vmem:[%s170 + $0x678] sm:$0xff]
        %v405 = vld [vmem:[%s170 + $0x680] sm:$0xff]
        %v406 = vld [vmem:[%s170 + $0x688] sm:$0xff]
        %v407 = vld [vmem:[%s170 + $0x690] sm:$0xff]
        %v408 = vld [vmem:[%s170 + $0x698] sm:$0xff]
        %v409 = vld [vmem:[%s170 + $0x6a0] sm:$0xff]
        %v410 = vld [vmem:[%s170 + $0x6a8] sm:$0xff]
        %v411 = vld [vmem:[%s170 + $0x6b0] sm:$0xff]
        %v412 = vld [vmem:[%s170 + $0x6b8] sm:$0xff]
        %v413 = vld [vmem:[%s170 + $0x6c0] sm:$0xff]
        %v414 = vld [vmem:[%s170 + $0x6c8] sm:$0xff]
        %v415 = vld [vmem:[%s170 + $0x6d0] sm:$0xff]
        %v416 = vld [vmem:[%s170 + $0x6d8] sm:$0xff]
        %v417 = vld [vmem:[%s170 + $0x6e0] sm:$0xff]
        %v418 = vld [vmem:[%s170 + $0x6e8] sm:$0xff]
        %v419 = vld [vmem:[%s170 + $0x6f0] sm:$0xff]
        %v420 = vld [vmem:[%s170 + $0x6f8] sm:$0xff]
        %v421 = vld [vmem:[%s170 + $0x700] sm:$0xff]
        %v422 = vld [vmem:[%s170 + $0x708] sm:$0xff]
        %v423 = vld [vmem:[%s170 + $0x710] sm:$0xff]
        %v424 = vld [vmem:[%s170 + $0x718] sm:$0xff]
        %v425 = vld [vmem:[%s170 + $0x720] sm:$0xff]
        %v426 = vld [vmem:[%s170 + $0x728] sm:$0xff]
        %v427 = vld [vmem:[%s170 + $0x730] sm:$0xff]
        %v428 = vld [vmem:[%s170 + $0x738] sm:$0xff]
        %v429 = vld [vmem:[%s170 + $0x740] sm:$0xff]
        %v430 = vld [vmem:[%s170 + $0x748] sm:$0xff]
        %v431 = vld [vmem:[%s170 + $0x750] sm:$0xff]
        %v432 = vld [vmem:[%s170 + $0x758] sm:$0xff]
        %v433 = vld [vmem:[%s170 + $0x760] sm:$0xff]
        %v434 = vld [vmem:[%s170 + $0x768] sm:$0xff]
        %v435 = vld [vmem:[%s170 + $0x770] sm:$0xff]
        %v436 = vld [vmem:[%s170 + $0x778] sm:$0xff]
        %v437 = vld [vmem:[%s170 + $0x780] sm:$0xff]
        %v438 = vld [vmem:[%s170 + $0x788] sm:$0xff]
        %v439 = vld [vmem:[%s170 + $0x790] sm:$0xff]
        %v440 = vld [vmem:[%s170 + $0x798] sm:$0xff]
        %v441 = vld [vmem:[%s170 + $0x7a0] sm:$0xff]
        %v442 = vld [vmem:[%s170 + $0x7a8] sm:$0xff]
        %v443 = vld [vmem:[%s170 + $0x7b0] sm:$0xff]
        %v444 = vld [vmem:[%s170 + $0x7b8] sm:$0xff]
        %v445 = vld [vmem:[%s170 + $0x7c0] sm:$0xff]
        %v446 = vld [vmem:[%s170 + $0x7c8] sm:$0xff]
        %v447 = vld [vmem:[%s170 + $0x7d0] sm:$0xff]
        %v448 = vld [vmem:[%s170 + $0x7d8] sm:$0xff]
        %v449 = vld [vmem:[%s170 + $0x7e0] sm:$0xff]
        %v450 = vld [vmem:[%s170 + $0x7e8] sm:$0xff]
        %v451 = vld [vmem:[%s170 + $0x7f0] sm:$0xff]
        %v452 = vld [vmem:[%s170 + $0x7f8] sm:$0xff]
        %v453 = vpack.c.bf16 %v199, %v197
        %v454 = vpack.c.bf16 %v200, %v198
        %v455 = vpack.c.bf16 %v203, %v201
        %v456 = vpack.c.bf16 %v204, %v202
        %v457 = vpack.c.bf16 %v207, %v205
        %v458 = vpack.c.bf16 %v208, %v206
        %v459 = vpack.c.bf16 %v211, %v209
        %v460 = vpack.c.bf16 %v212, %v210
        %v461 = vpack.c.bf16 %v215, %v213
        %v462 = vpack.c.bf16 %v216, %v214
        %v463 = vpack.c.bf16 %v219, %v217
        %v464 = vpack.c.bf16 %v220, %v218
        %v465 = vpack.c.bf16 %v223, %v221
        %v466 = vpack.c.bf16 %v224, %v222
        %v467 = vpack.c.bf16 %v227, %v225
        %v468 = vpack.c.bf16 %v228, %v226
        %v469 = vpack.c.bf16 %v231, %v229
        %v470 = vpack.c.bf16 %v232, %v230
        %v471 = vpack.c.bf16 %v235, %v233
        %v472 = vpack.c.bf16 %v236, %v234
        %v473 = vpack.c.bf16 %v239, %v237
        %v474 = vpack.c.bf16 %v240, %v238
        %v475 = vpack.c.bf16 %v243, %v241
        %v476 = vpack.c.bf16 %v244, %v242
        %v477 = vpack.c.bf16 %v247, %v245
        %v478 = vpack.c.bf16 %v248, %v246
        %v479 = vpack.c.bf16 %v251, %v249
        %v480 = vpack.c.bf16 %v252, %v250
        %v481 = vpack.c.bf16 %v255, %v253
        %v482 = vpack.c.bf16 %v256, %v254
        %v483 = vpack.c.bf16 %v259, %v257
        %v484 = vpack.c.bf16 %v260, %v258
        %v485 = vpack.c.bf16 %v263, %v261
        %v486 = vpack.c.bf16 %v264, %v262
        %v487 = vpack.c.bf16 %v267, %v265
        %v488 = vpack.c.bf16 %v268, %v266
        %v489 = vpack.c.bf16 %v271, %v269
        %v490 = vpack.c.bf16 %v272, %v270
        %v491 = vpack.c.bf16 %v275, %v273
        %v492 = vpack.c.bf16 %v276, %v274
        %v493 = vpack.c.bf16 %v279, %v277
        %v494 = vpack.c.bf16 %v280, %v278
        %v495 = vpack.c.bf16 %v283, %v281
        %v496 = vpack.c.bf16 %v284, %v282
        %v497 = vpack.c.bf16 %v287, %v285
        %v498 = vpack.c.bf16 %v288, %v286
        %v499 = vpack.c.bf16 %v291, %v289
        %v500 = vpack.c.bf16 %v292, %v290
        %v501 = vpack.c.bf16 %v295, %v293
        %v502 = vpack.c.bf16 %v296, %v294
        %v503 = vpack.c.bf16 %v299, %v297
        %v504 = vpack.c.bf16 %v300, %v298
        %v505 = vpack.c.bf16 %v303, %v301
        %v506 = vpack.c.bf16 %v304, %v302
        %v507 = vpack.c.bf16 %v307, %v305
        %v508 = vpack.c.bf16 %v308, %v306
        %v509 = vpack.c.bf16 %v311, %v309
        %v510 = vpack.c.bf16 %v312, %v310
        %v511 = vpack.c.bf16 %v315, %v313
        %v512 = vpack.c.bf16 %v316, %v314
        %v513 = vpack.c.bf16 %v319, %v317
        %v514 = vpack.c.bf16 %v320, %v318
        %v515 = vpack.c.bf16 %v323, %v321
        %v516 = vpack.c.bf16 %v324, %v322
        %v517 = vpack.c.bf16 %v327, %v325
        %v518 = vpack.c.bf16 %v328, %v326
        %v519 = vpack.c.bf16 %v331, %v329
        %v520 = vpack.c.bf16 %v332, %v330
        %v521 = vpack.c.bf16 %v335, %v333
        %v522 = vpack.c.bf16 %v336, %v334
        %v523 = vpack.c.bf16 %v339, %v337
        %v524 = vpack.c.bf16 %v340, %v338
        %v525 = vpack.c.bf16 %v343, %v341
        %v526 = vpack.c.bf16 %v344, %v342
        %v527 = vpack.c.bf16 %v347, %v345
        %v528 = vpack.c.bf16 %v348, %v346
        %v529 = vpack.c.bf16 %v351, %v349
        %v530 = vpack.c.bf16 %v352, %v350
        %v531 = vpack.c.bf16 %v355, %v353
        %v532 = vpack.c.bf16 %v356, %v354
        %v533 = vpack.c.bf16 %v359, %v357
        %v534 = vpack.c.bf16 %v360, %v358
        %v535 = vpack.c.bf16 %v363, %v361
        %v536 = vpack.c.bf16 %v364, %v362
        %v537 = vpack.c.bf16 %v367, %v365
        %v538 = vpack.c.bf16 %v368, %v366
        %v539 = vpack.c.bf16 %v371, %v369
        %v540 = vpack.c.bf16 %v372, %v370
        %v541 = vpack.c.bf16 %v375, %v373
        %v542 = vpack.c.bf16 %v376, %v374
        %v543 = vpack.c.bf16 %v379, %v377
        %v544 = vpack.c.bf16 %v380, %v378
        %v545 = vpack.c.bf16 %v383, %v381
        %v546 = vpack.c.bf16 %v384, %v382
        %v547 = vpack.c.bf16 %v387, %v385
        %v548 = vpack.c.bf16 %v388, %v386
        %v549 = vpack.c.bf16 %v391, %v389
        %v550 = vpack.c.bf16 %v392, %v390
        %v551 = vpack.c.bf16 %v395, %v393
        %v552 = vpack.c.bf16 %v396, %v394
        %v553 = vpack.c.bf16 %v399, %v397
        %v554 = vpack.c.bf16 %v400, %v398
        %v555 = vpack.c.bf16 %v403, %v401
        %v556 = vpack.c.bf16 %v404, %v402
        %v557 = vpack.c.bf16 %v407, %v405
        %v558 = vpack.c.bf16 %v408, %v406
        %v559 = vpack.c.bf16 %v411, %v409
        %v560 = vpack.c.bf16 %v412, %v410
        %v561 = vpack.c.bf16 %v415, %v413
        %v562 = vpack.c.bf16 %v416, %v414
        %v563 = vpack.c.bf16 %v419, %v417
        %v564 = vpack.c.bf16 %v420, %v418
        %v565 = vpack.c.bf16 %v423, %v421
        %v566 = vpack.c.bf16 %v424, %v422
        %v567 = vpack.c.bf16 %v427, %v425
        %v568 = vpack.c.bf16 %v428, %v426
        %v569 = vpack.c.bf16 %v431, %v429
        %v570 = vpack.c.bf16 %v432, %v430
        %v571 = vpack.c.bf16 %v435, %v433
        %v572 = vpack.c.bf16 %v436, %v434
        %v573 = vpack.c.bf16 %v439, %v437
        %v574 = vpack.c.bf16 %v440, %v438
        %v575 = vpack.c.bf16 %v443, %v441
        %v576 = vpack.c.bf16 %v444, %v442
        %v577 = vpack.c.bf16 %v447, %v445
        %v578 = vpack.c.bf16 %v448, %v446
        %v579 = vpack.c.bf16 %v451, %v449
        %v580 = vpack.c.bf16 %v452, %v450
        %v581 = vld [vmem:[#allocation5] sm:$0xff]
        %v582 = vld [vmem:[#allocation5 + $0x8] sm:$0xff]
        %v583 = vld [vmem:[#allocation5 + $0x10] sm:$0xff]
        %v584 = vld [vmem:[#allocation5 + $0x18] sm:$0xff]
        %v585 = vld [vmem:[#allocation5 + $0x20] sm:$0xff]
        %v586 = vld [vmem:[#allocation5 + $0x28] sm:$0xff]
        %v587 = vld [vmem:[#allocation5 + $0x30] sm:$0xff]
        %v588 = vld [vmem:[#allocation5 + $0x38] sm:$0xff]
        %v589 = vld [vmem:[#allocation5 + $0x40] sm:$0xff]
        %v590 = vld [vmem:[#allocation5 + $0x48] sm:$0xff]
        %v591 = vld [vmem:[#allocation5 + $0x50] sm:$0xff]
        %v592 = vld [vmem:[#allocation5 + $0x58] sm:$0xff]
        %v593 = vld [vmem:[#allocation5 + $0x60] sm:$0xff]
        %v594 = vld [vmem:[#allocation5 + $0x68] sm:$0xff]
        %v595 = vld [vmem:[#allocation5 + $0x70] sm:$0xff]
        %v596 = vld [vmem:[#allocation5 + $0x78] sm:$0xff]
        %v597 = vld [vmem:[#allocation5 + $0x80] sm:$0xff]
        %v598 = vld [vmem:[#allocation5 + $0x88] sm:$0xff]
        %v599 = vld [vmem:[#allocation5 + $0x90] sm:$0xff]
        %v600 = vld [vmem:[#allocation5 + $0x98] sm:$0xff]
        %v601 = vld [vmem:[#allocation5 + $0xa0] sm:$0xff]
        %v602 = vld [vmem:[#allocation5 + $0xa8] sm:$0xff]
        %v603 = vld [vmem:[#allocation5 + $0xb0] sm:$0xff]
        %v604 = vld [vmem:[#allocation5 + $0xb8] sm:$0xff]
        %v605 = vld [vmem:[#allocation5 + $0xc0] sm:$0xff]
        %v606 = vld [vmem:[#allocation5 + $0xc8] sm:$0xff]
        %v607 = vld [vmem:[#allocation5 + $0xd0] sm:$0xff]
        %v608 = vld [vmem:[#allocation5 + $0xd8] sm:$0xff]
        %v609 = vld [vmem:[#allocation5 + $0xe0] sm:$0xff]
        %v610 = vld [vmem:[#allocation5 + $0xe8] sm:$0xff]
        %v611 = vld [vmem:[#allocation5 + $0xf0] sm:$0xff]
        %v612 = vld [vmem:[#allocation5 + $0xf8] sm:$0xff]
        %v613 = vld [vmem:[#allocation5 + $0x100] sm:$0xff]
        %v614 = vld [vmem:[#allocation5 + $0x108] sm:$0xff]
        %v615 = vld [vmem:[#allocation5 + $0x110] sm:$0xff]
        %v616 = vld [vmem:[#allocation5 + $0x118] sm:$0xff]
        %v617 = vld [vmem:[#allocation5 + $0x120] sm:$0xff]
        %v618 = vld [vmem:[#allocation5 + $0x128] sm:$0xff]
        %v619 = vld [vmem:[#allocation5 + $0x130] sm:$0xff]
        %v620 = vld [vmem:[#allocation5 + $0x138] sm:$0xff]
        %v621 = vld [vmem:[#allocation5 + $0x140] sm:$0xff]
        %v622 = vld [vmem:[#allocation5 + $0x148] sm:$0xff]
        %v623 = vld [vmem:[#allocation5 + $0x150] sm:$0xff]
        %v624 = vld [vmem:[#allocation5 + $0x158] sm:$0xff]
        %v625 = vld [vmem:[#allocation5 + $0x160] sm:$0xff]
        %v626 = vld [vmem:[#allocation5 + $0x168] sm:$0xff]
        %v627 = vld [vmem:[#allocation5 + $0x170] sm:$0xff]
        %v628 = vld [vmem:[#allocation5 + $0x178] sm:$0xff]
        %v629 = vld [vmem:[#allocation5 + $0x180] sm:$0xff]
        %v630 = vld [vmem:[#allocation5 + $0x188] sm:$0xff]
        %v631 = vld [vmem:[#allocation5 + $0x190] sm:$0xff]
        %v632 = vld [vmem:[#allocation5 + $0x198] sm:$0xff]
        %v633 = vld [vmem:[#allocation5 + $0x1a0] sm:$0xff]
        %v634 = vld [vmem:[#allocation5 + $0x1a8] sm:$0xff]
        %v635 = vld [vmem:[#allocation5 + $0x1b0] sm:$0xff]
        %v636 = vld [vmem:[#allocation5 + $0x1b8] sm:$0xff]
        %v637 = vld [vmem:[#allocation5 + $0x1c0] sm:$0xff]
        %v638 = vld [vmem:[#allocation5 + $0x1c8] sm:$0xff]
        %v639 = vld [vmem:[#allocation5 + $0x1d0] sm:$0xff]
        %v640 = vld [vmem:[#allocation5 + $0x1d8] sm:$0xff]
        %v641 = vld [vmem:[#allocation5 + $0x1e0] sm:$0xff]
        %v642 = vld [vmem:[#allocation5 + $0x1e8] sm:$0xff]
        %v643 = vld [vmem:[#allocation5 + $0x1f0] sm:$0xff]
        %v644 = vld [vmem:[#allocation5 + $0x1f8] sm:$0xff]
        %v709 = vunpack.c.l.b16 %v581
        %v710 = vunpack.c.h.b16 %v581
        %v711 = vunpack.c.l.b16 %v582
        %v712 = vunpack.c.h.b16 %v582
        %v713 = vunpack.c.l.b16 %v583
        %v714 = vunpack.c.h.b16 %v583
        %v715 = vunpack.c.l.b16 %v584
        %v716 = vunpack.c.h.b16 %v584
        %v717 = vunpack.c.l.b16 %v585
        %v718 = vunpack.c.h.b16 %v585
        %v719 = vunpack.c.l.b16 %v586
        %v720 = vunpack.c.h.b16 %v586
        %v721 = vunpack.c.l.b16 %v587
        %v722 = vunpack.c.h.b16 %v587
        %v723 = vunpack.c.l.b16 %v588
        %v724 = vunpack.c.h.b16 %v588
        %v725 = vunpack.c.l.b16 %v589
        %v726 = vunpack.c.h.b16 %v589
        %v727 = vunpack.c.l.b16 %v590
        %v728 = vunpack.c.h.b16 %v590
        %v729 = vunpack.c.l.b16 %v591
        %v730 = vunpack.c.h.b16 %v591
        %v731 = vunpack.c.l.b16 %v592
        %v732 = vunpack.c.h.b16 %v592
        %v733 = vunpack.c.l.b16 %v593
        %v734 = vunpack.c.h.b16 %v593
        %v735 = vunpack.c.l.b16 %v594
        %v736 = vunpack.c.h.b16 %v594
        %v737 = vunpack.c.l.b16 %v595
        %v738 = vunpack.c.h.b16 %v595
        %v739 = vunpack.c.l.b16 %v596
        %v740 = vunpack.c.h.b16 %v596
        %v741 = vunpack.c.l.b16 %v597
        %v742 = vunpack.c.h.b16 %v597
        %v743 = vunpack.c.l.b16 %v598
        %v744 = vunpack.c.h.b16 %v598
        %v745 = vunpack.c.l.b16 %v599
        %v746 = vunpack.c.h.b16 %v599
        %v747 = vunpack.c.l.b16 %v600
        %v748 = vunpack.c.h.b16 %v600
        %v749 = vunpack.c.l.b16 %v601
        %v750 = vunpack.c.h.b16 %v601
        %v751 = vunpack.c.l.b16 %v602
        %v752 = vunpack.c.h.b16 %v602
        %v753 = vunpack.c.l.b16 %v603
        %v754 = vunpack.c.h.b16 %v603
        %v755 = vunpack.c.l.b16 %v604
        %v756 = vunpack.c.h.b16 %v604
        %v757 = vunpack.c.l.b16 %v605
        %v758 = vunpack.c.h.b16 %v605
        %v759 = vunpack.c.l.b16 %v606
        %v760 = vunpack.c.h.b16 %v606
        %v761 = vunpack.c.l.b16 %v607
        %v762 = vunpack.c.h.b16 %v607
        %v763 = vunpack.c.l.b16 %v608
        %v764 = vunpack.c.h.b16 %v608
        %v765 = vunpack.c.l.b16 %v609
        %v766 = vunpack.c.h.b16 %v609
        %v767 = vunpack.c.l.b16 %v610
        %v768 = vunpack.c.h.b16 %v610
        %v769 = vunpack.c.l.b16 %v611
        %v770 = vunpack.c.h.b16 %v611
        %v771 = vunpack.c.l.b16 %v612
        %v772 = vunpack.c.h.b16 %v612
        %v773 = vunpack.c.l.b16 %v613
        %v774 = vunpack.c.h.b16 %v613
        %v775 = vunpack.c.l.b16 %v614
        %v776 = vunpack.c.h.b16 %v614
        %v777 = vunpack.c.l.b16 %v615
        %v778 = vunpack.c.h.b16 %v615
        %v779 = vunpack.c.l.b16 %v616
        %v780 = vunpack.c.h.b16 %v616
        %v781 = vunpack.c.l.b16 %v617
        %v782 = vunpack.c.h.b16 %v617
        %v783 = vunpack.c.l.b16 %v618
        %v784 = vunpack.c.h.b16 %v618
        %v785 = vunpack.c.l.b16 %v619
        %v786 = vunpack.c.h.b16 %v619
        %v787 = vunpack.c.l.b16 %v620
        %v788 = vunpack.c.h.b16 %v620
        %v789 = vunpack.c.l.b16 %v621
        %v790 = vunpack.c.h.b16 %v621
        %v791 = vunpack.c.l.b16 %v622
        %v792 = vunpack.c.h.b16 %v622
        %v793 = vunpack.c.l.b16 %v623
        %v794 = vunpack.c.h.b16 %v623
        %v795 = vunpack.c.l.b16 %v624
        %v796 = vunpack.c.h.b16 %v624
        %v797 = vunpack.c.l.b16 %v625
        %v798 = vunpack.c.h.b16 %v625
        %v799 = vunpack.c.l.b16 %v626
        %v800 = vunpack.c.h.b16 %v626
        %v801 = vunpack.c.l.b16 %v627
        %v802 = vunpack.c.h.b16 %v627
        %v803 = vunpack.c.l.b16 %v628
        %v804 = vunpack.c.h.b16 %v628
        %v805 = vunpack.c.l.b16 %v629
        %v806 = vunpack.c.h.b16 %v629
        %v807 = vunpack.c.l.b16 %v630
        %v808 = vunpack.c.h.b16 %v630
        %v809 = vunpack.c.l.b16 %v631
        %v810 = vunpack.c.h.b16 %v631
        %v811 = vunpack.c.l.b16 %v632
        %v812 = vunpack.c.h.b16 %v632
        %v813 = vunpack.c.l.b16 %v633
        %v814 = vunpack.c.h.b16 %v633
        %v815 = vunpack.c.l.b16 %v634
        %v816 = vunpack.c.h.b16 %v634
        %v817 = vunpack.c.l.b16 %v635
        %v818 = vunpack.c.h.b16 %v635
        %v819 = vunpack.c.l.b16 %v636
        %v820 = vunpack.c.h.b16 %v636
        %v821 = vunpack.c.l.b16 %v637
        %v822 = vunpack.c.h.b16 %v637
        %v823 = vunpack.c.l.b16 %v638
        %v824 = vunpack.c.h.b16 %v638
        %v825 = vunpack.c.l.b16 %v639
        %v826 = vunpack.c.h.b16 %v639
        %v827 = vunpack.c.l.b16 %v640
        %v828 = vunpack.c.h.b16 %v640
        %v829 = vunpack.c.l.b16 %v641
        %v830 = vunpack.c.h.b16 %v641
        %v831 = vunpack.c.l.b16 %v642
        %v832 = vunpack.c.h.b16 %v642
        %v833 = vunpack.c.l.b16 %v643
        %v834 = vunpack.c.h.b16 %v643
        %v835 = vunpack.c.l.b16 %v644
        %v836 = vunpack.c.h.b16 %v644
        %v837 = vpack.c.b16 %v717, %v709
        %v838 = vpack.c.b16 %v718, %v710
        %v839 = vpack.c.b16 %v719, %v711
        %v840 = vpack.c.b16 %v720, %v712
        %v841 = vpack.c.b16 %v721, %v713
        %v842 = vpack.c.b16 %v722, %v714
        %v843 = vpack.c.b16 %v723, %v715
        %v844 = vpack.c.b16 %v724, %v716
        %v845 = vpack.c.b16 %v733, %v725
        %v846 = vpack.c.b16 %v734, %v726
        %v847 = vpack.c.b16 %v735, %v727
        %v848 = vpack.c.b16 %v736, %v728
        %v849 = vpack.c.b16 %v737, %v729
        %v850 = vpack.c.b16 %v738, %v730
        %v851 = vpack.c.b16 %v739, %v731
        %v852 = vpack.c.b16 %v740, %v732
        %v853 = vpack.c.b16 %v749, %v741
        %v854 = vpack.c.b16 %v750, %v742
        %v855 = vpack.c.b16 %v751, %v743
        %v856 = vpack.c.b16 %v752, %v744
        %v857 = vpack.c.b16 %v753, %v745
        %v858 = vpack.c.b16 %v754, %v746
        %v859 = vpack.c.b16 %v755, %v747
        %v860 = vpack.c.b16 %v756, %v748
        %v861 = vpack.c.b16 %v765, %v757
        %v862 = vpack.c.b16 %v766, %v758
        %v863 = vpack.c.b16 %v767, %v759
        %v864 = vpack.c.b16 %v768, %v760
        %v865 = vpack.c.b16 %v769, %v761
        %v866 = vpack.c.b16 %v770, %v762
        %v867 = vpack.c.b16 %v771, %v763
        %v868 = vpack.c.b16 %v772, %v764
        %v869 = vpack.c.b16 %v781, %v773
        %v870 = vpack.c.b16 %v782, %v774
        %v871 = vpack.c.b16 %v783, %v775
        %v872 = vpack.c.b16 %v784, %v776
        %v873 = vpack.c.b16 %v785, %v777
        %v874 = vpack.c.b16 %v786, %v778
        %v875 = vpack.c.b16 %v787, %v779
        %v876 = vpack.c.b16 %v788, %v780
        %v877 = vpack.c.b16 %v797, %v789
        %v878 = vpack.c.b16 %v798, %v790
        %v879 = vpack.c.b16 %v799, %v791
        %v880 = vpack.c.b16 %v800, %v792
        %v881 = vpack.c.b16 %v801, %v793
        %v882 = vpack.c.b16 %v802, %v794
        %v883 = vpack.c.b16 %v803, %v795
        %v884 = vpack.c.b16 %v804, %v796
        %v885 = vpack.c.b16 %v813, %v805
        %v886 = vpack.c.b16 %v814, %v806
        %v887 = vpack.c.b16 %v815, %v807
        %v888 = vpack.c.b16 %v816, %v808
        %v889 = vpack.c.b16 %v817, %v809
        %v890 = vpack.c.b16 %v818, %v810
        %v891 = vpack.c.b16 %v819, %v811
        %v892 = vpack.c.b16 %v820, %v812
        %v893 = vpack.c.b16 %v829, %v821
        %v894 = vpack.c.b16 %v830, %v822
        %v895 = vpack.c.b16 %v831, %v823
        %v896 = vpack.c.b16 %v832, %v824
        %v897 = vpack.c.b16 %v833, %v825
        %v898 = vpack.c.b16 %v834, %v826
        %v899 = vpack.c.b16 %v835, %v827
        %v900 = vpack.c.b16 %v836, %v828
        %965 = vmatprep.subr.bf16.mxu0 %v454
        %966 = vmatpush1.bf16.msra.mxu0 %v453
        %967 = vmatprep.subr.bf16.mxu0 %v456
        %968 = vmatpush1.bf16.msra.mxu0 %v455
        %969 = vmatprep.subr.bf16.mxu0 %v458
        %970 = vmatpush1.bf16.msra.mxu0 %v457
        %971 = vmatprep.subr.bf16.mxu0 %v460
        %972 = vmatpush1.bf16.msra.mxu0 %v459
        %973 = vmatprep.subr.bf16.mxu0 %v462
        %974 = vmatpush1.bf16.msra.mxu0 %v461
        %975 = vmatprep.subr.bf16.mxu0 %v464
        %976 = vmatpush1.bf16.msra.mxu0 %v463
        %977 = vmatprep.subr.bf16.mxu0 %v466
        %978 = vmatpush1.bf16.msra.mxu0 %v465
        %979 = vmatprep.subr.bf16.mxu0 %v468
        %980 = vmatpush1.bf16.msra.mxu0 %v467
        %981 = vmatprep.subr.bf16.mxu0 %v470
        %982 = vmatpush1.bf16.msra.mxu0 %v469
        %983 = vmatprep.subr.bf16.mxu0 %v472
        %984 = vmatpush1.bf16.msra.mxu0 %v471
        %985 = vmatprep.subr.bf16.mxu0 %v474
        %986 = vmatpush1.bf16.msra.mxu0 %v473
        %987 = vmatprep.subr.bf16.mxu0 %v476
        %988 = vmatpush1.bf16.msra.mxu0 %v475
        %989 = vmatprep.subr.bf16.mxu0 %v478
        %990 = vmatpush1.bf16.msra.mxu0 %v477
        %991 = vmatprep.subr.bf16.mxu0 %v480
        %992 = vmatpush1.bf16.msra.mxu0 %v479
        %993 = vmatprep.subr.bf16.mxu0 %v482
        %994 = vmatpush1.bf16.msra.mxu0 %v481
        %995 = vmatprep.subr.bf16.mxu0 %v484
        %996 = vmatpush1.bf16.msra.mxu0 %v483
        %997 = vmatprep.mubr.bf16.mxu0 %v838
        %998 = vmatmul.mubr.bf16.gmra.mrb[0].mxu0 %v837
        %v999 = vpop.f32.mrb[0].mxu0
        %v1000 = vadd.f32 0.0, %v999
        %v1001 = vpop.f32.mrb[0].mxu0
        %v1002 = vadd.f32 0.0, %v1001
        %v1003 = vpop.f32.mrb[0].mxu0
        %v1004 = vadd.f32 0.0, %v1003
        %v1005 = vpop.f32.mrb[0].mxu0
        %v1006 = vadd.f32 0.0, %v1005
        %1007 = vmatprep.mubr.bf16.mxu0 %v846
        %1008 = vmatmul.mubr.bf16.gmra.mrb[0].mxu0 %v845
        %v1009 = vpop.f32.mrb[0].mxu0
        %v1010 = vadd.f32 0.0, %v1009
        %v1011 = vpop.f32.mrb[0].mxu0
        %v1012 = vadd.f32 0.0, %v1011
        %v1013 = vpop.f32.mrb[0].mxu0
        %v1014 = vadd.f32 0.0, %v1013
        %v1015 = vpop.f32.mrb[0].mxu0
        %v1016 = vadd.f32 0.0, %v1015
        %1017 = vmatprep.mubr.bf16.mxu0 %v854
        %1018 = vmatmul.mubr.bf16.gmra.mrb[0].mxu0 %v853
        %v1019 = vpop.f32.mrb[0].mxu0
        %v1020 = vadd.f32 0.0, %v1019
        %v1021 = vpop.f32.mrb[0].mxu0
        %v1022 = vadd.f32 0.0, %v1021
        %v1023 = vpop.f32.mrb[0].mxu0
        %v1024 = vadd.f32 0.0, %v1023
        %v1025 = vpop.f32.mrb[0].mxu0
        %v1026 = vadd.f32 0.0, %v1025
        %1027 = vmatprep.mubr.bf16.mxu0 %v862
        %1028 = vmatmul.mubr.bf16.gmra.mrb[0].mxu0 %v861
        %v1029 = vpop.f32.mrb[0].mxu0
        %v1030 = vadd.f32 0.0, %v1029
        %v1031 = vpop.f32.mrb[0].mxu0
        %v1032 = vadd.f32 0.0, %v1031
        %v1033 = vpop.f32.mrb[0].mxu0
        %v1034 = vadd.f32 0.0, %v1033
        %v1035 = vpop.f32.mrb[0].mxu0
        %v1036 = vadd.f32 0.0, %v1035
        %1037 = vmatprep.mubr.bf16.mxu0 %v870
        %1038 = vmatmul.mubr.bf16.gmra.mrb[0].mxu0 %v869
        %v1039 = vpop.f32.mrb[0].mxu0
        %v1040 = vadd.f32 0.0, %v1039
        %v1041 = vpop.f32.mrb[0].mxu0
        %v1042 = vadd.f32 0.0, %v1041
        %v1043 = vpop.f32.mrb[0].mxu0
        %v1044 = vadd.f32 0.0, %v1043
        %v1045 = vpop.f32.mrb[0].mxu0
        %v1046 = vadd.f32 0.0, %v1045
        %1047 = vmatprep.mubr.bf16.mxu0 %v878
        %1048 = vmatmul.mubr.bf16.gmra.mrb[0].mxu0 %v877
        %v1049 = vpop.f32.mrb[0].mxu0
        %v1050 = vadd.f32 0.0, %v1049
        %v1051 = vpop.f32.mrb[0].mxu0
        %v1052 = vadd.f32 0.0, %v1051
        %v1053 = vpop.f32.mrb[0].mxu0
        %v1054 = vadd.f32 0.0, %v1053
        %v1055 = vpop.f32.mrb[0].mxu0
        %v1056 = vadd.f32 0.0, %v1055
        %1057 = vmatprep.mubr.bf16.mxu0 %v886
        %1058 = vmatmul.mubr.bf16.gmra.mrb[0].mxu0 %v885
        %v1059 = vpop.f32.mrb[0].mxu0
        %v1060 = vadd.f32 0.0, %v1059
        %v1061 = vpop.f32.mrb[0].mxu0
        %v1062 = vadd.f32 0.0, %v1061
        %v1063 = vpop.f32.mrb[0].mxu0
        %v1064 = vadd.f32 0.0, %v1063
        %v1065 = vpop.f32.mrb[0].mxu0
        %v1066 = vadd.f32 0.0, %v1065
        %1067 = vmatprep.mubr.bf16.mxu0 %v894
        %1068 = vmatmul.mubr.bf16.gmra.mrb[0].mxu0 %v893
        %v1069 = vpop.f32.mrb[0].mxu0
        %v1070 = vadd.f32 0.0, %v1069
        %v1071 = vpop.f32.mrb[0].mxu0
        %v1072 = vadd.f32 0.0, %v1071
        %v1073 = vpop.f32.mrb[0].mxu0
        %v1074 = vadd.f32 0.0, %v1073
        %v1075 = vpop.f32.mrb[0].mxu0
        %v1076 = vadd.f32 0.0, %v1075
        %1077 = vdwg.mxu0
        %1078 = vmatprep.subr.bf16.mxu0 %v486
        %1079 = vmatpush1.bf16.msra.mxu0 %v485
        %1080 = vmatprep.subr.bf16.mxu0 %v488
        %1081 = vmatpush1.bf16.msra.mxu0 %v487
        %1082 = vmatprep.subr.bf16.mxu0 %v490
        %1083 = vmatpush1.bf16.msra.mxu0 %v489
        %1084 = vmatprep.subr.bf16.mxu0 %v492
        %1085 = vmatpush1.bf16.msra.mxu0 %v491
        %1086 = vmatprep.subr.bf16.mxu0 %v494
        %1087 = vmatpush1.bf16.msra.mxu0 %v493
        %1088 = vmatprep.subr.bf16.mxu0 %v496
        %1089 = vmatpush1.bf16.msra.mxu0 %v495
        %1090 = vmatprep.subr.bf16.mxu0 %v498
        %1091 = vmatpush1.bf16.msra.mxu0 %v497
        %1092 = vmatprep.subr.bf16.mxu0 %v500
        %1093 = vmatpush1.bf16.msra.mxu0 %v499
        %1094 = vmatprep.subr.bf16.mxu0 %v502
        %1095 = vmatpush1.bf16.msra.mxu0 %v501
        %1096 = vmatprep.subr.bf16.mxu0 %v504
        %1097 = vmatpush1.bf16.msra.mxu0 %v503
        %1098 = vmatprep.subr.bf16.mxu0 %v506
        %1099 = vmatpush1.bf16.msra.mxu0 %v505
        %1100 = vmatprep.subr.bf16.mxu0 %v508
        %1101 = vmatpush1.bf16.msra.mxu0 %v507
        %1102 = vmatprep.subr.bf16.mxu0 %v510
        %1103 = vmatpush1.bf16.msra.mxu0 %v509
        %1104 = vmatprep.subr.bf16.mxu0 %v512
        %1105 = vmatpush1.bf16.msra.mxu0 %v511
        %1106 = vmatprep.subr.bf16.mxu0 %v514
        %1107 = vmatpush1.bf16.msra.mxu0 %v513
        %1108 = vmatprep.subr.bf16.mxu0 %v516
        %1109 = vmatpush1.bf16.msra.mxu0 %v515
        %1110 = vmatprep.mubr.bf16.mxu0 %v840
        %1111 = vmatmul.mubr.bf16.gmra.mrb[0].mxu0 %v839
        %v1112 = vpop.f32.mrb[0].mxu0
        %v1113 = vadd.f32 %v1000, %v1112
        %v1114 = vpop.f32.mrb[0].mxu0
        %v1115 = vadd.f32 %v1002, %v1114
        %v1116 = vpop.f32.mrb[0].mxu0
        %v1117 = vadd.f32 %v1004, %v1116
        %v1118 = vpop.f32.mrb[0].mxu0
        %v1119 = vadd.f32 %v1006, %v1118
        %1120 = vmatprep.mubr.bf16.mxu0 %v848
        %1121 = vmatmul.mubr.bf16.gmra.mrb[0].mxu0 %v847
        %v1122 = vpop.f32.mrb[0].mxu0
        %v1123 = vadd.f32 %v1010, %v1122
        %v1124 = vpop.f32.mrb[0].mxu0
        %v1125 = vadd.f32 %v1012, %v1124
        %v1126 = vpop.f32.mrb[0].mxu0
        %v1127 = vadd.f32 %v1014, %v1126
        %v1128 = vpop.f32.mrb[0].mxu0
        %v1129 = vadd.f32 %v1016, %v1128
        %1130 = vmatprep.mubr.bf16.mxu0 %v856
        %1131 = vmatmul.mubr.bf16.gmra.mrb[0].mxu0 %v855
        %v1132 = vpop.f32.mrb[0].mxu0
        %v1133 = vadd.f32 %v1020, %v1132
        %v1134 = vpop.f32.mrb[0].mxu0
        %v1135 = vadd.f32 %v1022, %v1134
        %v1136 = vpop.f32.mrb[0].mxu0
        %v1137 = vadd.f32 %v1024, %v1136
        %v1138 = vpop.f32.mrb[0].mxu0
        %v1139 = vadd.f32 %v1026, %v1138
        %1140 = vmatprep.mubr.bf16.mxu0 %v864
        %1141 = vmatmul.mubr.bf16.gmra.mrb[0].mxu0 %v863
        %v1142 = vpop.f32.mrb[0].mxu0
        %v1143 = vadd.f32 %v1030, %v1142
        %v1144 = vpop.f32.mrb[0].mxu0
        %v1145 = vadd.f32 %v1032, %v1144
        %v1146 = vpop.f32.mrb[0].mxu0
        %v1147 = vadd.f32 %v1034, %v1146
        %v1148 = vpop.f32.mrb[0].mxu0
        %v1149 = vadd.f32 %v1036, %v1148
        %1150 = vmatprep.mubr.bf16.mxu0 %v872
        %1151 = vmatmul.mubr.bf16.gmra.mrb[0].mxu0 %v871
        %v1152 = vpop.f32.mrb[0].mxu0
        %v1153 = vadd.f32 %v1040, %v1152
        %v1154 = vpop.f32.mrb[0].mxu0
        %v1155 = vadd.f32 %v1042, %v1154
        %v1156 = vpop.f32.mrb[0].mxu0
        %v1157 = vadd.f32 %v1044, %v1156
        %v1158 = vpop.f32.mrb[0].mxu0
        %v1159 = vadd.f32 %v1046, %v1158
        %1160 = vmatprep.mubr.bf16.mxu0 %v880
        %1161 = vmatmul.mubr.bf16.gmra.mrb[0].mxu0 %v879
        %v1162 = vpop.f32.mrb[0].mxu0
        %v1163 = vadd.f32 %v1050, %v1162
        %v1164 = vpop.f32.mrb[0].mxu0
        %v1165 = vadd.f32 %v1052, %v1164
        %v1166 = vpop.f32.mrb[0].mxu0
        %v1167 = vadd.f32 %v1054, %v1166
        %v1168 = vpop.f32.mrb[0].mxu0
        %v1169 = vadd.f32 %v1056, %v1168
        %1170 = vmatprep.mubr.bf16.mxu0 %v888
        %1171 = vmatmul.mubr.bf16.gmra.mrb[0].mxu0 %v887
        %v1172 = vpop.f32.mrb[0].mxu0
        %v1173 = vadd.f32 %v1060, %v1172
        %v1174 = vpop.f32.mrb[0].mxu0
        %v1175 = vadd.f32 %v1062, %v1174
        %v1176 = vpop.f32.mrb[0].mxu0
        %v1177 = vadd.f32 %v1064, %v1176
        %v1178 = vpop.f32.mrb[0].mxu0
        %v1179 = vadd.f32 %v1066, %v1178
        %1180 = vmatprep.mubr.bf16.mxu0 %v896
        %1181 = vmatmul.mubr.bf16.gmra.mrb[0].mxu0 %v895
        %v1182 = vpop.f32.mrb[0].mxu0
        %v1183 = vadd.f32 %v1070, %v1182
        %v1184 = vpop.f32.mrb[0].mxu0
        %v1185 = vadd.f32 %v1072, %v1184
        %v1186 = vpop.f32.mrb[0].mxu0
        %v1187 = vadd.f32 %v1074, %v1186
        %v1188 = vpop.f32.mrb[0].mxu0
        %v1189 = vadd.f32 %v1076, %v1188
        %1190 = vdwg.mxu0
        %1191 = vmatprep.subr.bf16.mxu0 %v518
        %1192 = vmatpush1.bf16.msra.mxu0 %v517
        %1193 = vmatprep.subr.bf16.mxu0 %v520
        %1194 = vmatpush1.bf16.msra.mxu0 %v519
        %1195 = vmatprep.subr.bf16.mxu0 %v522
        %1196 = vmatpush1.bf16.msra.mxu0 %v521
        %1197 = vmatprep.subr.bf16.mxu0 %v524
        %1198 = vmatpush1.bf16.msra.mxu0 %v523
        %1199 = vmatprep.subr.bf16.mxu0 %v526
        %1200 = vmatpush1.bf16.msra.mxu0 %v525
        %1201 = vmatprep.subr.bf16.mxu0 %v528
        %1202 = vmatpush1.bf16.msra.mxu0 %v527
        %1203 = vmatprep.subr.bf16.mxu0 %v530
        %1204 = vmatpush1.bf16.msra.mxu0 %v529
        %1205 = vmatprep.subr.bf16.mxu0 %v532
        %1206 = vmatpush1.bf16.msra.mxu0 %v531
        %1207 = vmatprep.subr.bf16.mxu0 %v534
        %1208 = vmatpush1.bf16.msra.mxu0 %v533
        %1209 = vmatprep.subr.bf16.mxu0 %v536
        %1210 = vmatpush1.bf16.msra.mxu0 %v535
        %1211 = vmatprep.subr.bf16.mxu0 %v538
        %1212 = vmatpush1.bf16.msra.mxu0 %v537
        %1213 = vmatprep.subr.bf16.mxu0 %v540
        %1214 = vmatpush1.bf16.msra.mxu0 %v539
        %1215 = vmatprep.subr.bf16.mxu0 %v542
        %1216 = vmatpush1.bf16.msra.mxu0 %v541
        %1217 = vmatprep.subr.bf16.mxu0 %v544
        %1218 = vmatpush1.bf16.msra.mxu0 %v543
        %1219 = vmatprep.subr.bf16.mxu0 %v546
        %1220 = vmatpush1.bf16.msra.mxu0 %v545
        %1221 = vmatprep.subr.bf16.mxu0 %v548
        %1222 = vmatpush1.bf16.msra.mxu0 %v547
        %1223 = vmatprep.mubr.bf16.mxu0 %v842
        %1224 = vmatmul.mubr.bf16.gmra.mrb[0].mxu0 %v841
        %v1225 = vpop.f32.mrb[0].mxu0
        %v1226 = vadd.f32 %v1113, %v1225
        %v1227 = vpop.f32.mrb[0].mxu0
        %v1228 = vadd.f32 %v1115, %v1227
        %v1229 = vpop.f32.mrb[0].mxu0
        %v1230 = vadd.f32 %v1117, %v1229
        %v1231 = vpop.f32.mrb[0].mxu0
        %v1232 = vadd.f32 %v1119, %v1231
        %1233 = vmatprep.mubr.bf16.mxu0 %v850
        %1234 = vmatmul.mubr.bf16.gmra.mrb[0].mxu0 %v849
        %v1235 = vpop.f32.mrb[0].mxu0
        %v1236 = vadd.f32 %v1123, %v1235
        %v1237 = vpop.f32.mrb[0].mxu0
        %v1238 = vadd.f32 %v1125, %v1237
        %v1239 = vpop.f32.mrb[0].mxu0
        %v1240 = vadd.f32 %v1127, %v1239
        %v1241 = vpop.f32.mrb[0].mxu0
        %v1242 = vadd.f32 %v1129, %v1241
        %1243 = vmatprep.mubr.bf16.mxu0 %v858
        %1244 = vmatmul.mubr.bf16.gmra.mrb[0].mxu0 %v857
        %v1245 = vpop.f32.mrb[0].mxu0
        %v1246 = vadd.f32 %v1133, %v1245
        %v1247 = vpop.f32.mrb[0].mxu0
        %v1248 = vadd.f32 %v1135, %v1247
        %v1249 = vpop.f32.mrb[0].mxu0
        %v1250 = vadd.f32 %v1137, %v1249
        %v1251 = vpop.f32.mrb[0].mxu0
        %v1252 = vadd.f32 %v1139, %v1251
        %1253 = vmatprep.mubr.bf16.mxu0 %v866
        %1254 = vmatmul.mubr.bf16.gmra.mrb[0].mxu0 %v865
        %v1255 = vpop.f32.mrb[0].mxu0
        %v1256 = vadd.f32 %v1143, %v1255
        %v1257 = vpop.f32.mrb[0].mxu0
        %v1258 = vadd.f32 %v1145, %v1257
        %v1259 = vpop.f32.mrb[0].mxu0
        %v1260 = vadd.f32 %v1147, %v1259
        %v1261 = vpop.f32.mrb[0].mxu0
        %v1262 = vadd.f32 %v1149, %v1261
        %1263 = vmatprep.mubr.bf16.mxu0 %v874
        %1264 = vmatmul.mubr.bf16.gmra.mrb[0].mxu0 %v873
        %v1265 = vpop.f32.mrb[0].mxu0
        %v1266 = vadd.f32 %v1153, %v1265
        %v1267 = vpop.f32.mrb[0].mxu0
        %v1268 = vadd.f32 %v1155, %v1267
        %v1269 = vpop.f32.mrb[0].mxu0
        %v1270 = vadd.f32 %v1157, %v1269
        %v1271 = vpop.f32.mrb[0].mxu0
        %v1272 = vadd.f32 %v1159, %v1271
        %1273 = vmatprep.mubr.bf16.mxu0 %v882
        %1274 = vmatmul.mubr.bf16.gmra.mrb[0].mxu0 %v881
        %v1275 = vpop.f32.mrb[0].mxu0
        %v1276 = vadd.f32 %v1163, %v1275
        %v1277 = vpop.f32.mrb[0].mxu0
        %v1278 = vadd.f32 %v1165, %v1277
        %v1279 = vpop.f32.mrb[0].mxu0
        %v1280 = vadd.f32 %v1167, %v1279
        %v1281 = vpop.f32.mrb[0].mxu0
        %v1282 = vadd.f32 %v1169, %v1281
        %1283 = vmatprep.mubr.bf16.mxu0 %v890
        %1284 = vmatmul.mubr.bf16.gmra.mrb[0].mxu0 %v889
        %v1285 = vpop.f32.mrb[0].mxu0
        %v1286 = vadd.f32 %v1173, %v1285
        %v1287 = vpop.f32.mrb[0].mxu0
        %v1288 = vadd.f32 %v1175, %v1287
        %v1289 = vpop.f32.mrb[0].mxu0
        %v1290 = vadd.f32 %v1177, %v1289
        %v1291 = vpop.f32.mrb[0].mxu0
        %v1292 = vadd.f32 %v1179, %v1291
        %1293 = vmatprep.mubr.bf16.mxu0 %v898
        %1294 = vmatmul.mubr.bf16.gmra.mrb[0].mxu0 %v897
        %v1295 = vpop.f32.mrb[0].mxu0
        %v1296 = vadd.f32 %v1183, %v1295
        %v1297 = vpop.f32.mrb[0].mxu0
        %v1298 = vadd.f32 %v1185, %v1297
        %v1299 = vpop.f32.mrb[0].mxu0
        %v1300 = vadd.f32 %v1187, %v1299
        %v1301 = vpop.f32.mrb[0].mxu0
        %v1302 = vadd.f32 %v1189, %v1301
        %1303 = vdwg.mxu0
        %1304 = vmatprep.subr.bf16.mxu0 %v550
        %1305 = vmatpush1.bf16.msra.mxu0 %v549
        %1306 = vmatprep.subr.bf16.mxu0 %v552
        %1307 = vmatpush1.bf16.msra.mxu0 %v551
        %1308 = vmatprep.subr.bf16.mxu0 %v554
        %1309 = vmatpush1.bf16.msra.mxu0 %v553
        %1310 = vmatprep.subr.bf16.mxu0 %v556
        %1311 = vmatpush1.bf16.msra.mxu0 %v555
        %1312 = vmatprep.subr.bf16.mxu0 %v558
        %1313 = vmatpush1.bf16.msra.mxu0 %v557
        %1314 = vmatprep.subr.bf16.mxu0 %v560
        %1315 = vmatpush1.bf16.msra.mxu0 %v559
        %1316 = vmatprep.subr.bf16.mxu0 %v562
        %1317 = vmatpush1.bf16.msra.mxu0 %v561
        %1318 = vmatprep.subr.bf16.mxu0 %v564
        %1319 = vmatpush1.bf16.msra.mxu0 %v563
        %1320 = vmatprep.subr.bf16.mxu0 %v566
        %1321 = vmatpush1.bf16.msra.mxu0 %v565
        %1322 = vmatprep.subr.bf16.mxu0 %v568
        %1323 = vmatpush1.bf16.msra.mxu0 %v567
        %1324 = vmatprep.subr.bf16.mxu0 %v570
        %1325 = vmatpush1.bf16.msra.mxu0 %v569
        %1326 = vmatprep.subr.bf16.mxu0 %v572
        %1327 = vmatpush1.bf16.msra.mxu0 %v571
        %1328 = vmatprep.subr.bf16.mxu0 %v574
        %1329 = vmatpush1.bf16.msra.mxu0 %v573
        %1330 = vmatprep.subr.bf16.mxu0 %v576
        %1331 = vmatpush1.bf16.msra.mxu0 %v575
        %1332 = vmatprep.subr.bf16.mxu0 %v578
        %1333 = vmatpush1.bf16.msra.mxu0 %v577
        %1334 = vmatprep.subr.bf16.mxu0 %v580
        %1335 = vmatpush1.bf16.msra.mxu0 %v579
        %1336 = vmatprep.mubr.bf16.mxu0 %v844
        %1337 = vmatmul.mubr.bf16.gmra.mrb[0].mxu0 %v843
        %v1338 = vpop.f32.mrb[0].mxu0
        %v1339 = vadd.f32 %v1226, %v1338
        %v1340 = vpop.f32.mrb[0].mxu0
        %v1341 = vadd.f32 %v1228, %v1340
        %v1342 = vpop.f32.mrb[0].mxu0
        %v1343 = vadd.f32 %v1230, %v1342
        %v1344 = vpop.f32.mrb[0].mxu0
        %v1345 = vadd.f32 %v1232, %v1344
        %1346 = vmatprep.mubr.bf16.mxu0 %v852
        %1347 = vmatmul.mubr.bf16.gmra.mrb[0].mxu0 %v851
        %v1348 = vpop.f32.mrb[0].mxu0
        %v1349 = vadd.f32 %v1236, %v1348
        %v1350 = vpop.f32.mrb[0].mxu0
        %v1351 = vadd.f32 %v1238, %v1350
        %v1352 = vpop.f32.mrb[0].mxu0
        %v1353 = vadd.f32 %v1240, %v1352
        %v1354 = vpop.f32.mrb[0].mxu0
        %v1355 = vadd.f32 %v1242, %v1354
        %1356 = vmatprep.mubr.bf16.mxu0 %v860
        %1357 = vmatmul.mubr.bf16.gmra.mrb[0].mxu0 %v859
        %v1358 = vpop.f32.mrb[0].mxu0
        %v1359 = vadd.f32 %v1246, %v1358
        %v1360 = vpop.f32.mrb[0].mxu0
        %v1361 = vadd.f32 %v1248, %v1360
        %v1362 = vpop.f32.mrb[0].mxu0
        %v1363 = vadd.f32 %v1250, %v1362
        %v1364 = vpop.f32.mrb[0].mxu0
        %v1365 = vadd.f32 %v1252, %v1364
        %1366 = vmatprep.mubr.bf16.mxu0 %v868
        %1367 = vmatmul.mubr.bf16.gmra.mrb[0].mxu0 %v867
        %v1368 = vpop.f32.mrb[0].mxu0
        %v1369 = vadd.f32 %v1256, %v1368
        %v1370 = vpop.f32.mrb[0].mxu0
        %v1371 = vadd.f32 %v1258, %v1370
        %v1372 = vpop.f32.mrb[0].mxu0
        %v1373 = vadd.f32 %v1260, %v1372
        %v1374 = vpop.f32.mrb[0].mxu0
        %v1375 = vadd.f32 %v1262, %v1374
        %1376 = vmatprep.mubr.bf16.mxu0 %v876
        %1377 = vmatmul.mubr.bf16.gmra.mrb[0].mxu0 %v875
        %v1378 = vpop.f32.mrb[0].mxu0
        %v1379 = vadd.f32 %v1266, %v1378
        %v1380 = vpop.f32.mrb[0].mxu0
        %v1381 = vadd.f32 %v1268, %v1380
        %v1382 = vpop.f32.mrb[0].mxu0
        %v1383 = vadd.f32 %v1270, %v1382
        %v1384 = vpop.f32.mrb[0].mxu0
        %v1385 = vadd.f32 %v1272, %v1384
        %1386 = vmatprep.mubr.bf16.mxu0 %v884
        %1387 = vmatmul.mubr.bf16.gmra.mrb[0].mxu0 %v883
        %v1388 = vpop.f32.mrb[0].mxu0
        %v1389 = vadd.f32 %v1276, %v1388
        %v1390 = vpop.f32.mrb[0].mxu0
        %v1391 = vadd.f32 %v1278, %v1390
        %v1392 = vpop.f32.mrb[0].mxu0
        %v1393 = vadd.f32 %v1280, %v1392
        %v1394 = vpop.f32.mrb[0].mxu0
        %v1395 = vadd.f32 %v1282, %v1394
        %1396 = vmatprep.mubr.bf16.mxu0 %v892
        %1397 = vmatmul.mubr.bf16.gmra.mrb[0].mxu0 %v891
        %v1398 = vpop.f32.mrb[0].mxu0
        %v1399 = vadd.f32 %v1286, %v1398
        %v1400 = vpop.f32.mrb[0].mxu0
        %v1401 = vadd.f32 %v1288, %v1400
        %v1402 = vpop.f32.mrb[0].mxu0
        %v1403 = vadd.f32 %v1290, %v1402
        %v1404 = vpop.f32.mrb[0].mxu0
        %v1405 = vadd.f32 %v1292, %v1404
        %1406 = vmatprep.mubr.bf16.mxu0 %v900
        %1407 = vmatmul.mubr.bf16.gmra.mrb[0].mxu0 %v899
        %v1408 = vpop.f32.mrb[0].mxu0
        %v1409 = vadd.f32 %v1296, %v1408
        %v1410 = vpop.f32.mrb[0].mxu0
        %v1411 = vadd.f32 %v1298, %v1410
        %v1412 = vpop.f32.mrb[0].mxu0
        %v1413 = vadd.f32 %v1300, %v1412
        %v1414 = vpop.f32.mrb[0].mxu0
        %v1415 = vadd.f32 %v1302, %v1414
        %1416 = vdwg.mxu0
        %v1417 = vmax.f32 %v1339, 0.0
        %v1418 = vmax.f32 %v1341, 0.0
        %v1419 = vmax.f32 %v1343, 0.0
        %v1420 = vmax.f32 %v1345, 0.0
        %v1421 = vmax.f32 %v1349, 0.0
        %v1422 = vmax.f32 %v1351, 0.0
        %v1423 = vmax.f32 %v1353, 0.0
        %v1424 = vmax.f32 %v1355, 0.0
        %v1425 = vmax.f32 %v1359, 0.0
        %v1426 = vmax.f32 %v1361, 0.0
        %v1427 = vmax.f32 %v1363, 0.0
        %v1428 = vmax.f32 %v1365, 0.0
        %v1429 = vmax.f32 %v1369, 0.0
        %v1430 = vmax.f32 %v1371, 0.0
        %v1431 = vmax.f32 %v1373, 0.0
        %v1432 = vmax.f32 %v1375, 0.0
        %v1433 = vmax.f32 %v1379, 0.0
        %v1434 = vmax.f32 %v1381, 0.0
        %v1435 = vmax.f32 %v1383, 0.0
        %v1436 = vmax.f32 %v1385, 0.0
        %v1437 = vmax.f32 %v1389, 0.0
        %v1438 = vmax.f32 %v1391, 0.0
        %v1439 = vmax.f32 %v1393, 0.0
        %v1440 = vmax.f32 %v1395, 0.0
        %v1441 = vmax.f32 %v1399, 0.0
        %v1442 = vmax.f32 %v1401, 0.0
        %v1443 = vmax.f32 %v1403, 0.0
        %v1444 = vmax.f32 %v1405, 0.0
        %v1445 = vmax.f32 %v1409, 0.0
        %v1446 = vmax.f32 %v1411, 0.0
        %v1447 = vmax.f32 %v1413, 0.0
        %v1448 = vmax.f32 %v1415, 0.0
        %v1449 = vpack.c.bf16 %v1419, %v1417
        %v1450 = vpack.c.bf16 %v1420, %v1418
        %v1451 = vpack.c.bf16 %v1423, %v1421
        %v1452 = vpack.c.bf16 %v1424, %v1422
        %v1453 = vpack.c.bf16 %v1427, %v1425
        %v1454 = vpack.c.bf16 %v1428, %v1426
        %v1455 = vpack.c.bf16 %v1431, %v1429
        %v1456 = vpack.c.bf16 %v1432, %v1430
        %v1457 = vpack.c.bf16 %v1435, %v1433
        %v1458 = vpack.c.bf16 %v1436, %v1434
        %v1459 = vpack.c.bf16 %v1439, %v1437
        %v1460 = vpack.c.bf16 %v1440, %v1438
        %v1461 = vpack.c.bf16 %v1443, %v1441
        %v1462 = vpack.c.bf16 %v1444, %v1442
        %v1463 = vpack.c.bf16 %v1447, %v1445
        %v1464 = vpack.c.bf16 %v1448, %v1446
        %v1481 = vunpack.c.l.b16 %v1449
        %v1482 = vunpack.c.l.b16 %v1450
        %v1483 = vunpack.c.h.b16 %v1449
        %v1484 = vunpack.c.h.b16 %v1450
        %v1485 = vunpack.c.l.b16 %v1451
        %v1486 = vunpack.c.l.b16 %v1452
        %v1487 = vunpack.c.h.b16 %v1451
        %v1488 = vunpack.c.h.b16 %v1452
        %v1489 = vunpack.c.l.b16 %v1453
        %v1490 = vunpack.c.l.b16 %v1454
        %v1491 = vunpack.c.h.b16 %v1453
        %v1492 = vunpack.c.h.b16 %v1454
        %v1493 = vunpack.c.l.b16 %v1455
        %v1494 = vunpack.c.l.b16 %v1456
        %v1495 = vunpack.c.h.b16 %v1455
        %v1496 = vunpack.c.h.b16 %v1456
        %v1497 = vunpack.c.l.b16 %v1457
        %v1498 = vunpack.c.l.b16 %v1458
        %v1499 = vunpack.c.h.b16 %v1457
        %v1500 = vunpack.c.h.b16 %v1458
        %v1501 = vunpack.c.l.b16 %v1459
        %v1502 = vunpack.c.l.b16 %v1460
        %v1503 = vunpack.c.h.b16 %v1459
        %v1504 = vunpack.c.h.b16 %v1460
        %v1505 = vunpack.c.l.b16 %v1461
        %v1506 = vunpack.c.l.b16 %v1462
        %v1507 = vunpack.c.h.b16 %v1461
        %v1508 = vunpack.c.h.b16 %v1462
        %v1509 = vunpack.c.l.b16 %v1463
        %v1510 = vunpack.c.l.b16 %v1464
        %v1511 = vunpack.c.h.b16 %v1463
        %v1512 = vunpack.c.h.b16 %v1464
        %v1513 = vpack.c.b16 %v1482, %v1481
        %v1514 = vpack.c.b16 %v1484, %v1483
        %v1515 = vpack.c.b16 %v1486, %v1485
        %v1516 = vpack.c.b16 %v1488, %v1487
        %v1517 = vpack.c.b16 %v1490, %v1489
        %v1518 = vpack.c.b16 %v1492, %v1491
        %v1519 = vpack.c.b16 %v1494, %v1493
        %v1520 = vpack.c.b16 %v1496, %v1495
        %v1521 = vpack.c.b16 %v1498, %v1497
        %v1522 = vpack.c.b16 %v1500, %v1499
        %v1523 = vpack.c.b16 %v1502, %v1501
        %v1524 = vpack.c.b16 %v1504, %v1503
        %v1525 = vpack.c.b16 %v1506, %v1505
        %v1526 = vpack.c.b16 %v1508, %v1507
        %v1527 = vpack.c.b16 %v1510, %v1509
        %v1528 = vpack.c.b16 %v1512, %v1511
        %1545 = vst [vmem:[%s194] sm:$0xff] %v1513
        %1546 = vst [vmem:[%s194 + $0x8] sm:$0xff] %v1514
        %1547 = vst [vmem:[%s194 + $0x10] sm:$0xff] %v1515
        %1548 = vst [vmem:[%s194 + $0x18] sm:$0xff] %v1516
        %1549 = vst [vmem:[%s194 + $0x20] sm:$0xff] %v1517
        %1550 = vst [vmem:[%s194 + $0x28] sm:$0xff] %v1518
        %1551 = vst [vmem:[%s194 + $0x30] sm:$0xff] %v1519
        %1552 = vst [vmem:[%s194 + $0x38] sm:$0xff] %v1520
        %1553 = vst [vmem:[%s194 + $0x40] sm:$0xff] %v1521
        %1554 = vst [vmem:[%s194 + $0x48] sm:$0xff] %v1522
        %1555 = vst [vmem:[%s194 + $0x50] sm:$0xff] %v1523
        %1556 = vst [vmem:[%s194 + $0x58] sm:$0xff] %v1524
        %1557 = vst [vmem:[%s194 + $0x60] sm:$0xff] %v1525
        %1558 = vst [vmem:[%s194 + $0x68] sm:$0xff] %v1526
        %1559 = vst [vmem:[%s194 + $0x70] sm:$0xff] %v1527
        %1560 = vst [vmem:[%s194 + $0x78] sm:$0xff] %v1528
        %s1561 = sand.u32 %s91, 1
        %s1562 = scalar_lea.sflag [#allocation4], %s1561
        %s1563 = sand.u32 %s91, 1
        %s1564 = smul.addr %s1563, 128
        %s1565 = scalar_lea.vmem [#allocation7], %s1564
        // Predicated region
        $region37: #{tpu_custom_call.1} parent=27 // pred_check
          %p1566 = pneg %p101
        $region38: #{tpu_custom_call.1} parent=27 // pred_check_branch
          %1568 = sbr.rel (%p1566) target = $region40
        $region39: #{tpu_custom_call.1} parent=27 // pred_region
          %s1569 = smul.u32 2, %s25
          %s1571 = ssub.s32 2048, 2048
          %1572 = vsyncadd %s1562, %s1571
          %s1573 = smul.addr %s24, 32
          %s1574 = sadd.s32 %s1569, %s1573
          %s1575 = smul.addr %s1574, 64
          %s1576 = scalar_lea.hbm %s2, %s1575
          %s1577 = sshll.u32 %s1565, 4
          %s1578 = int_to_ptr.vmem [resolvable:$true] %s1577
          %1583 = dma.vmem_to_hbm [thread:$0]  %s1578, 2048, %s1576, %s1562, 128, 128, 8
        $region40: #{tpu_custom_call.1} parent=27 // pred_fallthru
          _
      $region28: #{tpu_custom_call.1} parent=5 // pred_fallthru
        _
      %p1584 = scmp.le.s32.totalorder 2, %s15
      // Predicated region
      $region41: #{tpu_custom_call.1} parent=5 // pred_check
        %p1585 = pneg %p1584
      $region42: #{tpu_custom_call.1} parent=5 // pred_check_branch
        %1587 = sbr.rel (%p1585) target = $region44
      $region43: #{tpu_custom_call.1} parent=5 // pred_region
        %s1588 = ssub.s32 %s15, 2
        // Predicated region
        $region45: #{tpu_custom_call.1} parent=43 // pred_check
          %p1589 = pneg %p107
        $region46: #{tpu_custom_call.1} parent=43 // pred_check_branch
          %1591 = sbr.rel (%p1589) target = $region48
        $region47: #{tpu_custom_call.1} parent=43 // pred_region
          %s1592 = sand.u32 %s92, 1
          %s1593 = scalar_lea.sflag [#allocation4], %s1592
          %s1594 = sand.u32 %s92, 1
          %s1595 = smul.addr %s1594, 128
          %s1596 = scalar_lea.vmem [#allocation7], %s1595
          %1597 = dma.done %s1593, 2048
        $region48: #{tpu_custom_call.1} parent=43 // pred_fallthru
          _
      $region44: #{tpu_custom_call.1} parent=5 // pred_fallthru
        _
    $region6: #{tpu_custom_call.1} parent=1 // loop_footer
      %s19 = sadd.s32 1, %s15
    $region7: #{tpu_custom_call.1} parent=1 // loop_footer_branch
      %14 = sbr.rel target = $region3
    $region8: #{tpu_custom_call.1} parent=1 // loop_exit
      _
    %1598 = vsyncpa [#allocation3], 1
    %s1599 = scalar_lea.sflag [#allocation3], 1
    %1600 = vsyncpa %s1599, 1
    %1601 = vsyncpa [#allocation6], 1
    %1602 = vsyncpa [#allocation4], 1
    %s1603 = scalar_lea.sflag [#allocation4], 1
    %1604 = vsyncpa %s1603, 1

</llo_original>
